<compile_context>
chip_gen: v6e
topology: v6e:2x2x1
jax: 0.10.0
libtpu: 0.0.40
codegen_flags: <defaults>
</compile_context>

<pallas_src>
import functools

import jax
import jax.numpy as jnp
from jax.experimental import pallas as pl
from jax.experimental.pallas import tpu as pltpu

_NUM_CORE_SPLITS = 2     # leading "parallel" axis -> v7x megacore split (harmless on 1-TC chips)
_TILE_ROWS_MAX = 4096    # rows per tile; multiple of 256 so packed loc blocks obey (8,128)


def _sla_loss_kernel(logits_ref, tgt_ref, locp_ref, loct_ref, locm_ref, out_ref,
                     *, n_rows):
    ci = pl.program_id(0)            # core-split index ("parallel")
    ii = pl.program_id(1)            # row-tile index  ("arbitrary", carries accumulator)
    tr = logits_ref.shape[0]

    # ---- init this core's resident accumulator block ----
    @pl.when(ii == 0)
    def _():
        out_ref[...] = jnp.zeros_like(out_ref)

    # Row validity from the *unclamped* tile position: masks (a) rows past the true
    # B*T in the last partial tile and (b) whole duplicated tiles when the block
    # index had to be clamped.  jnp.where keeps any OOB garbage out of the sums.
    row0 = (ci * pl.num_programs(1) + ii) * tr
    row_ids = row0 + jax.lax.broadcasted_iota(jnp.int32, (tr, 1), 0)
    valid = row_ids < n_rows

    # ---- structure branch: per-row cross-entropy (log-softmax + iota-mask gather) ----
    # TODO(synk): with C << 128 the class axis fills only C of 128 lanes; a transposed
    # (C, rows) layout would fill lanes but needs a sublane-axis reduction.
    logits = logits_ref[...].astype(jnp.float32)                    # (tr, C)
    ncls = logits.shape[1]
    m = jnp.max(logits, axis=1, keepdims=True)
    lse = jnp.log(jnp.sum(jnp.exp(logits - m), axis=1, keepdims=True)) + m
    cls_ids = jax.lax.broadcasted_iota(jnp.int32, (tr, ncls), 1)
    picked = jnp.sum(jnp.where(cls_ids == tgt_ref[...], logits, 0.0),
                     axis=1, keepdims=True)                         # logit[target]
    ce_sum = jnp.sum(jnp.where(valid, lse - picked, 0.0))

    # ---- location branch: masked smooth-L1 (beta = 1), lane-dense blocks ----
    # (padded rows carry mask == 0, so no extra validity handling is needed here)
    mask = locm_ref[...].astype(jnp.float32)
    d = (locp_ref[...].astype(jnp.float32) - loct_ref[...].astype(jnp.float32)) * mask
    ad = jnp.abs(d)
    sl1 = jnp.where(ad < 1.0, 0.5 * d * d, ad - 0.5)
    sl1_sum = jnp.sum(sl1)
    mask_sum = jnp.sum(mask)

    # ---- accumulate raw partial sums into lanes 0/1/2 of the output block ----
    lane = jax.lax.broadcasted_iota(jnp.int32, (1, 8, 128), 2)
    contrib = (jnp.where(lane == 0, ce_sum, 0.0)
               + jnp.where(lane == 1, sl1_sum, 0.0)
               + jnp.where(lane == 2, mask_sum, 0.0))
    out_ref[...] += contrib


def sla_loss(structure_probs, structure_targets, loc_targets, loc_targets_mask,
             loc_preds, *, structure_weight=1.0, loc_weight=2.0, eps=1e-12):
    """JAX/Pallas equivalent of SLALoss.forward.

    structure_probs: (B, T, C) float logits   (= predicts['structure_probs'])
    structure_targets: (B, T+1) int           (= batch[1])
    loc_targets: (B, T+1, 4) float            (= batch[2])
    loc_targets_mask: (B, T+1, 4) float       (= batch[3])
    loc_preds: (B, T, 4) float                (= predicts['loc_preds'])
    """
    b, t, c = structure_probs.shape
    n = b * t

    # Glue (cheap reshapes / tiny int target slice).  Heavy tensors keep their native
    # dtype -- casting to f32 happens inside the kernel (halves DMA bytes for bf16).
    logits = structure_probs.reshape(n, c)
    tgt = structure_targets[:, 1:].astype(jnp.int32).reshape(n, 1)
    loc_p = loc_preds.reshape(n, 4)
    loc_t = loc_targets[:, 1:, :].reshape(n, 4)
    loc_m = loc_targets_mask[:, 1:, :].reshape(n, 4)

    # Row tile: multiple of 256 (so packed loc blocks (tr//32, 128) obey (8,128)),
    # capped so double-buffered logits + targets stay well under the v5e scoped VMEM.
    c_pad = ((c + 127) // 128) * 128
    bytes_per_row = c_pad * logits.dtype.itemsize + 128 * 4
    tr_cap = max(256, ((8 * 1024 * 1024) // (2 * bytes_per_row) // 256) * 256)
    tr = int(min(_TILE_ROWS_MAX, tr_cap, max(256, (n // 256) * 256)))

    if n < tr:                       # tiny inputs: pad rows up to one tile (cheap)
        pad = tr - n
        logits = jnp.pad(logits, ((0, pad), (0, 0)))
        tgt = jnp.pad(tgt, ((0, pad), (0, 0)))
        loc_p = jnp.pad(loc_p, ((0, pad), (0, 0)))
        loc_t = jnp.pad(loc_t, ((0, pad), (0, 0)))
        loc_m = jnp.pad(loc_m, ((0, pad), (0, 0)))

    nb = (logits.shape[0] + tr - 1) // tr                 # row tiles backed by real data
    inner = (nb + _NUM_CORE_SPLITS - 1) // _NUM_CORE_SPLITS
    n_step_rows = _NUM_CORE_SPLITS * inner * tr           # rows covered by the full grid

    # loc tensors are small: pad them so every grid step is in-bounds (mask pads to 0),
    # then pack lane-dense: (rows, 4) -> (rows*4/128, 128).
    loc_pad = n_step_rows - loc_p.shape[0]
    if loc_pad:
        loc_p = jnp.pad(loc_p, ((0, loc_pad), (0, 0)))
        loc_t = jnp.pad(loc_t, ((0, loc_pad), (0, 0)))
        loc_m = jnp.pad(loc_m, ((0, loc_pad), (0, 0)))
    loc_p = loc_p.reshape(n_step_rows // 32, 128)
    loc_t = loc_t.reshape(n_step_rows // 32, 128)
    loc_m = loc_m.reshape(n_step_rows // 32, 128)

    def row_map(ci, ii):
        # Clamp so steps past the last real tile re-read a valid tile; the kernel's
        # validity mask (built from the unclamped position) zeroes their contribution.
        return (jnp.minimum(ci * inner + ii, nb - 1), 0)

    def loc_map(ci, ii):
        return (ci * inner + ii, 0)

    kernel = functools.partial(_sla_loss_kernel, n_rows=n)

    cost = pl.CostEstimate(
        flops=int(8 * n * c + 12 * 4 * n),
        transcendentals=int(n * (c + 1)),
        bytes_accessed=int(logits.size * logits.dtype.itemsize
                           + tgt.size * tgt.dtype.itemsize
                           + 3 * loc_p.size * loc_p.dtype.itemsize),
    )

    partials = pl.pallas_call(
        kernel,
        out_shape=jax.ShapeDtypeStruct((_NUM_CORE_SPLITS, 8, 128), jnp.float32),
        grid=(_NUM_CORE_SPLITS, inner),
        in_specs=[
            pl.BlockSpec((tr, c), row_map),              # logits
            pl.BlockSpec((tr, 1), row_map),              # int targets
            pl.BlockSpec((tr // 32, 128), loc_map),      # loc preds   (lane-dense)
            pl.BlockSpec((tr // 32, 128), loc_map),      # loc targets (lane-dense)
            pl.BlockSpec((tr // 32, 128), loc_map),      # loc mask    (lane-dense)
        ],
        out_specs=pl.BlockSpec((1, 8, 128), lambda ci, ii: (ci, 0, 0)),
        compiler_params=pltpu.CompilerParams(
            dimension_semantics=("parallel", "arbitrary")),
        cost_estimate=cost,
    )(logits, tgt, loc_p, loc_t, loc_m)

    # Tiny scalar epilogue: combine per-core partial sums and apply weights / eps.
    sums = partials[:, 0, :3]                           # (cores, 3)
    sum_ce = jnp.sum(sums[:, 0])
    sum_sl1 = jnp.sum(sums[:, 1])
    sum_mask = jnp.sum(sums[:, 2])

    structure_loss = (sum_ce / jnp.float32(n)) * jnp.float32(structure_weight)
    loc_loss = (sum_sl1 * jnp.float32(loc_weight)) / (sum_mask + jnp.float32(eps))
    total = structure_loss + loc_loss
    return {"loss": total, "structure_loss": structure_loss, "loc_loss": loc_loss}


def _reference(structure_probs, structure_targets, loc_targets, loc_targets_mask,
               loc_preds, structure_weight, loc_weight, eps=1e-12):
    # Pure-JAX reference mirroring the PyTorch module (sanity check only).
    b, t, c = structure_probs.shape
    logits = structure_probs.reshape(b * t, c).astype(jnp.float32)
    tgt = structure_targets[:, 1:].astype(jnp.int32).reshape(b * t)
    logp = jax.nn.log_softmax(logits, axis=-1)
    ce = -jnp.take_along_axis(logp, tgt[:, None], axis=1)
    structure_loss = jnp.mean(ce) * structure_weight

    loc_t = loc_targets[:, 1:, :].astype(jnp.float32)
    loc_m = loc_targets_mask[:, 1:, :].astype(jnp.float32)
    d = loc_preds * loc_m - loc_t * loc_m
    ad = jnp.abs(d)
    sl1 = jnp.where(ad < 1.0, 0.5 * d * d, ad - 0.5)
    loc_loss = jnp.sum(sl1) * loc_weight / (jnp.sum(loc_m) + eps)
    return structure_loss + loc_loss, structure_loss, loc_loss


if __name__ == "__main__":
    key = jax.random.PRNGKey(0)
    B, L, C = 2, 9, 32          # original seq length L; model predicts L-1 steps
    T = L - 1

    k1, k2, k3, k4, k5 = jax.random.split(key, 5)
    structure_probs = jax.random.normal(k1, (B, T, C), dtype=jnp.float32)
    structure_targets = jax.random.randint(k2, (B, L), 0, C, dtype=jnp.int32)
    loc_targets = jax.random.uniform(k3, (B, L, 4), dtype=jnp.float32)
    loc_targets_mask = (jax.random.uniform(k4, (B, L, 4)) > 0.3).astype(jnp.float32)
    loc_preds = jax.random.uniform(k5, (B, T, 4), dtype=jnp.float32)

    structure_weight, loc_weight = 1.0, 2.0

    out = sla_loss(structure_probs, structure_targets, loc_targets, loc_targets_mask,
                   loc_preds, structure_weight=structure_weight, loc_weight=loc_weight)
    out = jax.tree_util.tree_map(jax.block_until_ready, out)

    ref_total, ref_struct, ref_loc = _reference(
        structure_probs, structure_targets, loc_targets, loc_targets_mask,
        loc_preds, structure_weight, loc_weight)

    assert jnp.allclose(out["loss"], ref_total, rtol=1e-4, atol=1e-5)
    assert jnp.allclose(out["structure_loss"], ref_struct, rtol=1e-4, atol=1e-5)
    assert jnp.allclose(out["loc_loss"], ref_loc, rtol=1e-4, atol=1e-5)

    print("KERNEL_OK")
</pallas_src>

<mosaic_0001>
module attributes {stable_mosaic.version = 11 : i64} {
  func.func @_sla_loss_kernel(%arg0: i32, %arg1: i32, %arg2: memref<256x32xf32, #tpu.memory_space<vmem>>, %arg3: memref<256x1xi32, #tpu.memory_space<vmem>>, %arg4: memref<8x128xf32, #tpu.memory_space<vmem>>, %arg5: memref<8x128xf32, #tpu.memory_space<vmem>>, %arg6: memref<8x128xf32, #tpu.memory_space<vmem>>, %arg7: memref<1x8x128xf32, #tpu.memory_space<vmem>>) attributes {dimension_semantics = [#tpu.dimension_semantics<parallel>, #tpu.dimension_semantics<arbitrary>], iteration_bounds = array<i64: 2, 1>, scalar_prefetch = 0 : i64, scratch_operands = 0 : i64, tpu.core_type = #tpu.core_type<tc>, window_params = [{transform_indices = @transform_0, window_bounds = array<i64: 256, 32>}, {transform_indices = @transform_1, window_bounds = array<i64: 256, 1>}, {transform_indices = @transform_2, window_bounds = array<i64: 8, 128>}, {transform_indices = @transform_3, window_bounds = array<i64: 8, 128>}, {transform_indices = @transform_4, window_bounds = array<i64: 8, 128>}, {transform_indices = @transform_5, window_bounds = array<i64: 1, 8, 128>}]} {
    %c0_i32 = arith.constant 0 : i32
    %0 = arith.cmpi eq, %arg1, %c0_i32 : i32
    %1 = arith.extui %0 : i1 to i32
    %c0_i32_0 = arith.constant 0 : i32
    %2 = arith.cmpi ne, %1, %c0_i32_0 : i32
    scf.if %2 {
      %cst_31 = arith.constant 0.000000e+00 : f32
      %79 = vector.broadcast %cst_31 : f32 to vector<1x8x128xf32>
      %c0_32 = arith.constant 0 : index
      %c0_33 = arith.constant 0 : index
      %c0_34 = arith.constant 0 : index
      %80 = vector.load %arg7[%c0_32, %c0_33, %c0_34] : memref<1x8x128xf32, #tpu.memory_space<vmem>>, vector<1x8x128xf32>
      tpu.vector_store %arg7[%c0_32, %c0_33, %c0_34], %79 {strides = array<i32>} : memref<1x8x128xf32, #tpu.memory_space<vmem>>, vector<1x8x128xf32>,
    } else {
    }
    %c1_i32 = arith.constant 1 : i32
    %3 = arith.muli %arg0, %c1_i32 : i32
    %4 = arith.addi %3, %arg1 : i32
    %c256_i32 = arith.constant 256 : i32
    %5 = arith.muli %4, %c256_i32 : i32
    %6 = tpu.iota {dimensions = array<i32: 0>} : vector<256x1xi32>
    %7 = vector.broadcast %5 : i32 to vector<256x1xi32>
    %8 = arith.addi %7, %6 : vector<256x1xi32>
    %c16_i32 = arith.constant 16 : i32
    %9 = vector.broadcast %c16_i32 : i32 to vector<256x1xi32>
    %10 = arith.cmpi slt, %8, %9 : vector<256x1xi32>
    %c0 = arith.constant 0 : index
    %c0_1 = arith.constant 0 : index
    %11 = vector.load %arg2[%c0, %c0_1] : memref<256x32xf32, #tpu.memory_space<vmem>>, vector<256x32xf32>
    %cst = arith.constant dense<0xFF800000> : vector<256xf32>
    %12 = vector.multi_reduction <maximumf>, %11, %cst [1] : vector<256x32xf32> to vector<256xf32>
    %13 = vector.shape_cast %12 : vector<256xf32> to vector<256x1xf32>
    %14 = vector.broadcast %13 : vector<256x1xf32> to vector<256x32xf32>
    %15 = arith.subf %11, %14 : vector<256x32xf32>
    %16 = math.exp %15 : vector<256x32xf32>
    %cst_2 = arith.constant dense<0.000000e+00> : vector<256xf32>
    %17 = vector.multi_reduction <add>, %16, %cst_2 [1] : vector<256x32xf32> to vector<256xf32>
    %18 = vector.shape_cast %17 : vector<256xf32> to vector<256x1xf32>
    %19 = math.log %18 : vector<256x1xf32>
    %20 = arith.addf %19, %13 : vector<256x1xf32>
    %21 = tpu.iota {dimensions = array<i32: 1>} : vector<256x32xi32>
    %c0_3 = arith.constant 0 : index
    %c0_4 = arith.constant 0 : index
    %22 = vector.load %arg3[%c0_3, %c0_4] : memref<256x1xi32, #tpu.memory_space<vmem>>, vector<256x1xi32>
    %23 = vector.broadcast %22 : vector<256x1xi32> to vector<256x32xi32>
    %24 = arith.cmpi eq, %21, %23 : vector<256x32xi32>
    %cst_5 = arith.constant 0.000000e+00 : f32
    %25 = vector.broadcast %cst_5 : f32 to vector<256x32xf32>
    %26 = arith.select %24, %11, %25 : vector<256x32xi1>, vector<256x32xf32>
    %cst_6 = arith.constant dense<0.000000e+00> : vector<256xf32>
    %27 = vector.multi_reduction <add>, %26, %cst_6 [1] : vector<256x32xf32> to vector<256xf32>
    %28 = vector.shape_cast %27 : vector<256xf32> to vector<256x1xf32>
    %29 = arith.subf %20, %28 : vector<256x1xf32>
    %cst_7 = arith.constant 0.000000e+00 : f32
    %30 = vector.broadcast %cst_7 : f32 to vector<256x1xf32>
    %31 = arith.select %10, %29, %30 : vector<256x1xi1>, vector<256x1xf32>
    %32 = vector.shape_cast %31 : vector<256x1xf32> to vector<1x256x1xf32>
    %cst_8 = arith.constant dense<0.000000e+00> : vector<1xf32>
    %33 = vector.multi_reduction <add>, %32, %cst_8 [1, 2] : vector<1x256x1xf32> to vector<1xf32>
    %34 = vector.shape_cast %33 : vector<1xf32> to vector<1x1x1xf32>
    %35 = vector.extract %34[0, 0, 0] : f32 from vector<1x1x1xf32>
    %c0_9 = arith.constant 0 : index
    %c0_10 = arith.constant 0 : index
    %36 = vector.load %arg6[%c0_9, %c0_10] : memref<8x128xf32, #tpu.memory_space<vmem>>, vector<8x128xf32>
    %c0_11 = arith.constant 0 : index
    %c0_12 = arith.constant 0 : index
    %37 = vector.load %arg4[%c0_11, %c0_12] : memref<8x128xf32, #tpu.memory_space<vmem>>, vector<8x128xf32>
    %c0_13 = arith.constant 0 : index
    %c0_14 = arith.constant 0 : index
    %38 = vector.load %arg5[%c0_13, %c0_14] : memref<8x128xf32, #tpu.memory_space<vmem>>, vector<8x128xf32>
    %39 = arith.subf %37, %38 : vector<8x128xf32>
    %40 = arith.mulf %39, %36 : vector<8x128xf32>
    %41 = math.absf %40 : vector<8x128xf32>
    %cst_15 = arith.constant 1.000000e+00 : f32
    %42 = vector.broadcast %cst_15 : f32 to vector<8x128xf32>
    %43 = arith.cmpf olt, %41, %42 : vector<8x128xf32>
    %cst_16 = arith.constant 5.000000e-01 : f32
    %44 = vector.broadcast %cst_16 : f32 to vector<8x128xf32>
    %45 = arith.mulf %44, %40 : vector<8x128xf32>
    %46 = arith.mulf %45, %40 : vector<8x128xf32>
    %cst_17 = arith.constant 5.000000e-01 : f32
    %47 = vector.broadcast %cst_17 : f32 to vector<8x128xf32>
    %48 = arith.subf %41, %47 : vector<8x128xf32>
    %49 = arith.select %43, %46, %48 : vector<8x128xi1>, vector<8x128xf32>
    %50 = vector.shape_cast %49 : vector<8x128xf32> to vector<1x8x128xf32>
    %cst_18 = arith.constant dense<0.000000e+00> : vector<1xf32>
    %51 = vector.multi_reduction <add>, %50, %cst_18 [1, 2] : vector<1x8x128xf32> to vector<1xf32>
    %52 = vector.shape_cast %51 : vector<1xf32> to vector<1x1x1xf32>
    %53 = vector.extract %52[0, 0, 0] : f32 from vector<1x1x1xf32>
    %54 = vector.shape_cast %36 : vector<8x128xf32> to vector<1x8x128xf32>
    %cst_19 = arith.constant dense<0.000000e+00> : vector<1xf32>
    %55 = vector.multi_reduction <add>, %54, %cst_19 [1, 2] : vector<1x8x128xf32> to vector<1xf32>
    %56 = vector.shape_cast %55 : vector<1xf32> to vector<1x1x1xf32>
    %57 = vector.extract %56[0, 0, 0] : f32 from vector<1x1x1xf32>
    %58 = tpu.iota {dimensions = array<i32: 2>} : vector<1x8x128xi32>
    %c0_i32_20 = arith.constant 0 : i32
    %59 = vector.broadcast %c0_i32_20 : i32 to vector<1x8x128xi32>
    %60 = arith.cmpi eq, %58, %59 : vector<1x8x128xi32>
    %cst_21 = arith.constant 0.000000e+00 : f32
    %61 = vector.broadcast %35 : f32 to vector<1x8x128xf32>
    %62 = vector.broadcast %cst_21 : f32 to vector<1x8x128xf32>
    %63 = arith.select %60, %61, %62 : vector<1x8x128xi1>, vector<1x8x128xf32>
    %c1_i32_22 = arith.constant 1 : i32
    %64 = vector.broadcast %c1_i32_22 : i32 to vector<1x8x128xi32>
    %65 = arith.cmpi eq, %58, %64 : vector<1x8x128xi32>
    %cst_23 = arith.constant 0.000000e+00 : f32
    %66 = vector.broadcast %53 : f32 to vector<1x8x128xf32>
    %67 = vector.broadcast %cst_23 : f32 to vector<1x8x128xf32>
    %68 = arith.select %65, %66, %67 : vector<1x8x128xi1>, vector<1x8x128xf32>
    %69 = arith.addf %63, %68 : vector<1x8x128xf32>
    %c2_i32 = arith.constant 2 : i32
    %70 = vector.broadcast %c2_i32 : i32 to vector<1x8x128xi32>
    %71 = arith.cmpi eq, %58, %70 : vector<1x8x128xi32>
    %cst_24 = arith.constant 0.000000e+00 : f32
    %72 = vector.broadcast %57 : f32 to vector<1x8x128xf32>
    %73 = vector.broadcast %cst_24 : f32 to vector<1x8x128xf32>
    %74 = arith.select %71, %72, %73 : vector<1x8x128xi1>, vector<1x8x128xf32>
    %75 = arith.addf %69, %74 : vector<1x8x128xf32>
    %c0_25 = arith.constant 0 : index
    %c0_26 = arith.constant 0 : index
    %c0_27 = arith.constant 0 : index
    %76 = vector.load %arg7[%c0_25, %c0_26, %c0_27] : memref<1x8x128xf32, #tpu.memory_space<vmem>>, vector<1x8x128xf32>
    %77 = arith.addf %76, %75 : vector<1x8x128xf32>
    %c0_28 = arith.constant 0 : index
    %c0_29 = arith.constant 0 : index
    %c0_30 = arith.constant 0 : index
    %78 = vector.load %arg7[%c0_28, %c0_29, %c0_30] : memref<1x8x128xf32, #tpu.memory_space<vmem>>, vector<1x8x128xf32>
    tpu.vector_store %arg7[%c0_28, %c0_29, %c0_30], %77 {strides = array<i32>} : memref<1x8x128xf32, #tpu.memory_space<vmem>>, vector<1x8x128xf32>,
    return
  }
  func.func @transform_0(%arg0: i32, %arg1: i32) -> (i32, i32) {
    %c1_i32 = arith.constant 1 : i32
    %0 = arith.muli %arg0, %c1_i32 : i32
    %1 = arith.addi %0, %arg1 : i32
    %c0_i32 = arith.constant 0 : i32
    %2 = arith.minsi %1, %c0_i32 : i32
    %c0_i32_0 = arith.constant 0 : i32
    %c0_i32_1 = arith.constant 0 : i32
    return %2, %c0_i32_0 : i32, i32
  }
  func.func @transform_1(%arg0: i32, %arg1: i32) -> (i32, i32) {
    %c1_i32 = arith.constant 1 : i32
    %0 = arith.muli %arg0, %c1_i32 : i32
    %1 = arith.addi %0, %arg1 : i32
    %c0_i32 = arith.constant 0 : i32
    %2 = arith.minsi %1, %c0_i32 : i32
    %c0_i32_0 = arith.constant 0 : i32
    %c0_i32_1 = arith.constant 0 : i32
    return %2, %c0_i32_0 : i32, i32
  }
  func.func @transform_2(%arg0: i32, %arg1: i32) -> (i32, i32) {
    %c1_i32 = arith.constant 1 : i32
    %0 = arith.muli %arg0, %c1_i32 : i32
    %1 = arith.addi %0, %arg1 : i32
    %c0_i32 = arith.constant 0 : i32
    %c0_i32_0 = arith.constant 0 : i32
    return %1, %c0_i32 : i32, i32
  }
  func.func @transform_3(%arg0: i32, %arg1: i32) -> (i32, i32) {
    %c1_i32 = arith.constant 1 : i32
    %0 = arith.muli %arg0, %c1_i32 : i32
    %1 = arith.addi %0, %arg1 : i32
    %c0_i32 = arith.constant 0 : i32
    %c0_i32_0 = arith.constant 0 : i32
    return %1, %c0_i32 : i32, i32
  }
  func.func @transform_4(%arg0: i32, %arg1: i32) -> (i32, i32) {
    %c1_i32 = arith.constant 1 : i32
    %0 = arith.muli %arg0, %c1_i32 : i32
    %1 = arith.addi %0, %arg1 : i32
    %c0_i32 = arith.constant 0 : i32
    %c0_i32_0 = arith.constant 0 : i32
    return %1, %c0_i32 : i32, i32
  }
  func.func @transform_5(%arg0: i32, %arg1: i32) -> (i32, i32, i32) {
    %c0_i32 = arith.constant 0 : i32
    %c0_i32_0 = arith.constant 0 : i32
    %c0_i32_1 = arith.constant 0 : i32
    return %arg0, %c0_i32, %c0_i32_0 : i32, i32, i32
  }
}

</mosaic_0001>

<llo_original>
// kernel: tpu_custom_call.1
$region0: #{tpu_custom_call.1}
  #allocation0 [shape = 'u32[]', space=smem, size = 0x4, offset = 0x4, fixed_abs, tag = 'smem constant byte address 0x4 - core index']
  #allocation1 [shape = 'u32[144,128]{1,0:T(1,128)}', space=vmem, size = 0x12000, scoped, tag = 'internal scratch']
  %s0 = inlined_call_operand.vmem [shape: f32[256,32], index: 0, kind: input, shape index: {}]
  %s1 = inlined_call_operand.vmem [shape: s32[256,1], index: 1, kind: input, shape index: {}]
  %s2 = inlined_call_operand.vmem [shape: f32[16,128], index: 2, kind: input, shape index: {}]
  %s3 = inlined_call_operand.vmem [shape: f32[16,128], index: 3, kind: input, shape index: {}]
  %s4 = inlined_call_operand.vmem [shape: f32[16,128], index: 4, kind: input, shape index: {}]
  %s5 = inlined_call_operand.hbm [shape: f32[2,8,128], index: 5, kind: output, shape index: {}]
  %s6 = sld [smem:[#allocation0]]
  $region57: #{tpu_custom_call.1} parent=0
    _
  %s8 = ssub.s32 1, %s6
  %s9 = scalar_select 0, %s8, %s6
  $region1: #{tpu_custom_call.1} parent=0
    #allocation2 [shape = 'u8[8192]{0}', space=vmem, size = 0x2000, scoped, tag = 'output window, operand 0']
    #allocation3 [shape = 's32[2]{0}', space=sflag, size = 0x8, scoped, tag = 'scoped memory for tpu_custom_call.1']
    %10 = vsyncpa [#allocation3], 0
    %s11 = scalar_lea.sflag [#allocation3], 1
    %12 = vsyncpa %s11, 0
    loop: start=0, step=1, limit=4
    $region2: #{tpu_custom_call.1} parent=1 // loop_pre_header
      _
    $region3: #{tpu_custom_call.1} parent=1 // loop_header
      %s14 = sphi 0, %s18
      %p15 = scmp.ge.s32.totalorder %s14, 4
      %s21 = sphi 0, %s33
      %s22 = sphi 0, %s29
      %s23 = sphi 0, %s21
      %s24 = sphi 0, %s22
      %s25 = sphi 0, %s23
      %s26 = sphi 0, %s24
      %s42 = sphi 0, %s44
      %s45 = sphi 0, %s42
      %s46 = sphi 0, %s45
      %s62 = sphi 0, %s46
      %s74 = sphi 0, %s76
      %s77 = sphi 0, %s74
      %s78 = sphi 0, %s77
      %s94 = sphi 0, %s78
      %s102 = sphi 0, %s104
      %s105 = sphi 0, %s102
      %s106 = sphi 0, %s105
      %s122 = sphi 0, %s106
      %s130 = sphi 0, %s132
      %s133 = sphi 0, %s130
      %s134 = sphi 0, %s133
      %s150 = sphi 0, %s134
      %s158 = sphi 0, %s160
      %s161 = sphi 0, %s158
      %s162 = sphi 0, %s161
      %s178 = sphi 0, %s162
      %s184 = sphi 0, %s186
      %s187 = sphi 0, %s184
      %s188 = sphi 0, %s187
      %s204 = sphi 0, %s188
    $region4: #{tpu_custom_call.1} parent=1 // loop_header_branch
      %17 = sbr.rel (%p15) target = $region8
    $region5: #{tpu_custom_call.1} parent=1 // loop_body
      %s19 = ssub.s32 %s14, 1
      %s20 = ssub.s32 %s14, 2
      %s27 = sadd.s32 1, %s22
      %p28 = scmp.ge.s32.totalorder %s27, 1
      %s29 = scalar_select %p28, 0, %s27
      %s30 = sadd.s32 1, %s21
      %s31 = scalar_select %p28, %s30, %s21
      %p32 = scmp.ge.s32.totalorder %s31, 2
      %s33 = scalar_select %p32, 0, %s31
      %s34 = sadd.s32 %s21, %s22
      %p35 = scmp.lt.s32.totalorder %s34, 0
      %s36 = scalar_select %p35, %s34, 0
      %s37 = sadd.s32 %s33, %s29
      %p38 = scmp.lt.s32.totalorder %s37, 0
      %s39 = scalar_select %p38, %s37, 0
      %s40 = ssub.s32 %s36, %s39
      %p41 = scmp.eq.s32.totalorder %s40, 0
      %s43 = sadd.s32 %s42, 1
      %s44 = scalar_select %p41, %s42, %s43
      %p47 = pneg %p41
      %p48 = scmp.eq.s32.totalorder %s14, 1
      %p49 = por %p47, %p48
      %p50 = scmp.ne.s32.totalorder %s42, %s45
      %p51 = scmp.eq.s32.totalorder %s14, 0
      %p52 = por %p50, %p51
      %p53 = scmp.ne.s32.totalorder %s42, %s45
      %p54 = scmp.eq.s32.totalorder %s19, 1
      %p55 = por %p53, %p54
      %p56 = scmp.ne.s32.totalorder %s45, %s46
      %p57 = scmp.eq.s32.totalorder %s19, 0
      %p58 = por %p56, %p57
      %p59 = scmp.ne.s32.totalorder %s45, %s46
      %p60 = scmp.eq.s32.totalorder %s20, 1
      %p61 = por %p59, %p60
      %p63 = scmp.ne.s32.totalorder %s46, %s62
      %p64 = scmp.eq.s32.totalorder %s20, 0
      %p65 = por %p63, %p64
      %s66 = sadd.s32 %s21, %s22
      %p67 = scmp.lt.s32.totalorder %s66, 0
      %s68 = scalar_select %p67, %s66, 0
      %s69 = sadd.s32 %s33, %s29
      %p70 = scmp.lt.s32.totalorder %s69, 0
      %s71 = scalar_select %p70, %s69, 0
      %s72 = ssub.s32 %s68, %s71
      %p73 = scmp.eq.s32.totalorder %s72, 0
      %s75 = sadd.s32 %s74, 1
      %s76 = scalar_select %p73, %s74, %s75
      %p79 = pneg %p73
      %p80 = scmp.eq.s32.totalorder %s14, 1
      %p81 = por %p79, %p80
      %p82 = scmp.ne.s32.totalorder %s74, %s77
      %p83 = scmp.eq.s32.totalorder %s14, 0
      %p84 = por %p82, %p83
      %p85 = scmp.ne.s32.totalorder %s74, %s77
      %p86 = scmp.eq.s32.totalorder %s19, 1
      %p87 = por %p85, %p86
      %p88 = scmp.ne.s32.totalorder %s77, %s78
      %p89 = scmp.eq.s32.totalorder %s19, 0
      %p90 = por %p88, %p89
      %p91 = scmp.ne.s32.totalorder %s77, %s78
      %p92 = scmp.eq.s32.totalorder %s20, 1
      %p93 = por %p91, %p92
      %p95 = scmp.ne.s32.totalorder %s78, %s94
      %p96 = scmp.eq.s32.totalorder %s20, 0
      %p97 = por %p95, %p96
      %s98 = sadd.s32 %s21, %s22
      %s99 = sadd.s32 %s33, %s29
      %s100 = ssub.s32 %s98, %s99
      %p101 = scmp.eq.s32.totalorder %s100, 0
      %s103 = sadd.s32 %s102, 1
      %s104 = scalar_select %p101, %s102, %s103
      %p107 = pneg %p101
      %p108 = scmp.eq.s32.totalorder %s14, 1
      %p109 = por %p107, %p108
      %p110 = scmp.ne.s32.totalorder %s102, %s105
      %p111 = scmp.eq.s32.totalorder %s14, 0
      %p112 = por %p110, %p111
      %p113 = scmp.ne.s32.totalorder %s102, %s105
      %p114 = scmp.eq.s32.totalorder %s19, 1
      %p115 = por %p113, %p114
      %p116 = scmp.ne.s32.totalorder %s105, %s106
      %p117 = scmp.eq.s32.totalorder %s19, 0
      %p118 = por %p116, %p117
      %p119 = scmp.ne.s32.totalorder %s105, %s106
      %p120 = scmp.eq.s32.totalorder %s20, 1
      %p121 = por %p119, %p120
      %p123 = scmp.ne.s32.totalorder %s106, %s122
      %p124 = scmp.eq.s32.totalorder %s20, 0
      %p125 = por %p123, %p124
      %s126 = sadd.s32 %s21, %s22
      %s127 = sadd.s32 %s33, %s29
      %s128 = ssub.s32 %s126, %s127
      %p129 = scmp.eq.s32.totalorder %s128, 0
      %s131 = sadd.s32 %s130, 1
      %s132 = scalar_select %p129, %s130, %s131
      %p135 = pneg %p129
      %p136 = scmp.eq.s32.totalorder %s14, 1
      %p137 = por %p135, %p136
      %p138 = scmp.ne.s32.totalorder %s130, %s133
      %p139 = scmp.eq.s32.totalorder %s14, 0
      %p140 = por %p138, %p139
      %p141 = scmp.ne.s32.totalorder %s130, %s133
      %p142 = scmp.eq.s32.totalorder %s19, 1
      %p143 = por %p141, %p142
      %p144 = scmp.ne.s32.totalorder %s133, %s134
      %p145 = scmp.eq.s32.totalorder %s19, 0
      %p146 = por %p144, %p145
      %p147 = scmp.ne.s32.totalorder %s133, %s134
      %p148 = scmp.eq.s32.totalorder %s20, 1
      %p149 = por %p147, %p148
      %p151 = scmp.ne.s32.totalorder %s134, %s150
      %p152 = scmp.eq.s32.totalorder %s20, 0
      %p153 = por %p151, %p152
      %s154 = sadd.s32 %s21, %s22
      %s155 = sadd.s32 %s33, %s29
      %s156 = ssub.s32 %s154, %s155
      %p157 = scmp.eq.s32.totalorder %s156, 0
      %s159 = sadd.s32 %s158, 1
      %s160 = scalar_select %p157, %s158, %s159
      %p163 = pneg %p157
      %p164 = scmp.eq.s32.totalorder %s14, 1
      %p165 = por %p163, %p164
      %p166 = scmp.ne.s32.totalorder %s158, %s161
      %p167 = scmp.eq.s32.totalorder %s14, 0
      %p168 = por %p166, %p167
      %p169 = scmp.ne.s32.totalorder %s158, %s161
      %p170 = scmp.eq.s32.totalorder %s19, 1
      %p171 = por %p169, %p170
      %p172 = scmp.ne.s32.totalorder %s161, %s162
      %p173 = scmp.eq.s32.totalorder %s19, 0
      %p174 = por %p172, %p173
      %p175 = scmp.ne.s32.totalorder %s161, %s162
      %p176 = scmp.eq.s32.totalorder %s20, 1
      %p177 = por %p175, %p176
      %p179 = scmp.ne.s32.totalorder %s162, %s178
      %p180 = scmp.eq.s32.totalorder %s20, 0
      %p181 = por %p179, %p180
      %s182 = ssub.s32 %s21, %s33
      %p183 = scmp.eq.s32.totalorder %s182, 0
      %s185 = sadd.s32 %s184, 1
      %s186 = scalar_select %p183, %s184, %s185
      %p189 = pneg %p183
      %p190 = scmp.eq.s32.totalorder %s14, 1
      %p191 = por %p189, %p190
      %p192 = scmp.ne.s32.totalorder %s184, %s187
      %p193 = scmp.eq.s32.totalorder %s14, 0
      %p194 = por %p192, %p193
      %p195 = scmp.ne.s32.totalorder %s184, %s187
      %p196 = scmp.eq.s32.totalorder %s19, 1
      %p197 = por %p195, %p196
      %p198 = scmp.ne.s32.totalorder %s187, %s188
      %p199 = scmp.eq.s32.totalorder %s19, 0
      %p200 = por %p198, %p199
      %p201 = scmp.ne.s32.totalorder %s187, %s188
      %p202 = scmp.eq.s32.totalorder %s20, 1
      %p203 = por %p201, %p202
      %p205 = scmp.ne.s32.totalorder %s188, %s204
      %p206 = scmp.eq.s32.totalorder %s20, 0
      %p207 = por %p205, %p206
      %p208 = scmp.le.s32.totalorder 1, %s14
      %p209 = scmp.lt.s32.totalorder %s14, 3
      %p210 = pnand %p208, %p209
      %p211 = pneg %p210
      // Predicated region
      $region9: #{tpu_custom_call.1} parent=5 // pred_check
        _
      $region10: #{tpu_custom_call.1} parent=5 // pred_check_branch
        %213 = sbr.rel (%p210) target = $region12
      $region11: #{tpu_custom_call.1} parent=5 // pred_region
        %s214 = ssub.s32 %s14, 1
      $region12: #{tpu_custom_call.1} parent=5 // pred_fallthru
        _
      %p215 = scmp.lt.s32.totalorder %s14, 2
      // Predicated region
      $region13: #{tpu_custom_call.1} parent=5 // pred_check
        %p216 = pneg %p215
      $region14: #{tpu_custom_call.1} parent=5 // pred_check_branch
        %218 = sbr.rel (%p216) target = $region16
      $region15: #{tpu_custom_call.1} parent=5 // pred_region
        // Predicated region
        $region17: #{tpu_custom_call.1} parent=15 // pred_check
          %p219 = pneg %p52
        $region18: #{tpu_custom_call.1} parent=15 // pred_check_branch
          %221 = sbr.rel (%p219) target = $region20
        $region19: #{tpu_custom_call.1} parent=15 // pred_region
          %s222 = sadd.s32 %s21, %s22
          %p223 = scmp.lt.s32.totalorder %s222, 0
          %s224 = scalar_select %p223, %s222, 0
          %s225 = smul.u32 32, %s224
          %p226 = scmp.lt.s32.totalorder %s225, 31
          %s227 = scalar_select %p226, %s225, 31
          %s228 = smul.addr %s227, 8
          %s229 = scalar_lea.vmem %s0, %s228
          %s230 = sadd.s32 %s21, %s22
          %p231 = scmp.lt.s32.totalorder %s230, 0
          %s232 = scalar_select %p231, %s230, 0
          %s233 = smul.u32 32, %s232
        $region20: #{tpu_custom_call.1} parent=15 // pred_fallthru
          _
        // Predicated region
        $region21: #{tpu_custom_call.1} parent=15 // pred_check
          %p234 = pneg %p84
        $region22: #{tpu_custom_call.1} parent=15 // pred_check_branch
          %236 = sbr.rel (%p234) target = $region24
        $region23: #{tpu_custom_call.1} parent=15 // pred_region
          %s237 = sadd.s32 %s21, %s22
          %p238 = scmp.lt.s32.totalorder %s237, 0
          %s239 = scalar_select %p238, %s237, 0
          %s240 = smul.u32 32, %s239
          %p241 = scmp.lt.s32.totalorder %s240, 31
          %s242 = scalar_select %p241, %s240, 31
          %s243 = smul.addr %s242, 8
          %s244 = scalar_lea.vmem %s1, %s243
          %s245 = sadd.s32 %s21, %s22
          %p246 = scmp.lt.s32.totalorder %s245, 0
          %s247 = scalar_select %p246, %s245, 0
          %s248 = smul.u32 32, %s247
        $region24: #{tpu_custom_call.1} parent=15 // pred_fallthru
          _
        // Predicated region
        $region25: #{tpu_custom_call.1} parent=15 // pred_check
          %p249 = pneg %p112
        $region26: #{tpu_custom_call.1} parent=15 // pred_check_branch
          %251 = sbr.rel (%p249) target = $region28
        $region27: #{tpu_custom_call.1} parent=15 // pred_region
          %s252 = sadd.s32 %s21, %s22
          %p253 = scmp.lt.s32.totalorder %s252, 1
          %s254 = scalar_select %p253, %s252, 1
          %s255 = smul.addr %s254, 8
          %s256 = scalar_lea.vmem %s2, %s255
          %s257 = sadd.s32 %s21, %s22
        $region28: #{tpu_custom_call.1} parent=15 // pred_fallthru
          _
        // Predicated region
        $region29: #{tpu_custom_call.1} parent=15 // pred_check
          %p258 = pneg %p140
        $region30: #{tpu_custom_call.1} parent=15 // pred_check_branch
          %260 = sbr.rel (%p258) target = $region32
        $region31: #{tpu_custom_call.1} parent=15 // pred_region
          %s261 = sadd.s32 %s21, %s22
          %p262 = scmp.lt.s32.totalorder %s261, 1
          %s263 = scalar_select %p262, %s261, 1
          %s264 = smul.addr %s263, 8
          %s265 = scalar_lea.vmem %s3, %s264
          %s266 = sadd.s32 %s21, %s22
        $region32: #{tpu_custom_call.1} parent=15 // pred_fallthru
          _
        // Predicated region
        $region33: #{tpu_custom_call.1} parent=15 // pred_check
          %p267 = pneg %p168
        $region34: #{tpu_custom_call.1} parent=15 // pred_check_branch
          %269 = sbr.rel (%p267) target = $region36
        $region35: #{tpu_custom_call.1} parent=15 // pred_region
          %s270 = sadd.s32 %s21, %s22
          %p271 = scmp.lt.s32.totalorder %s270, 1
          %s272 = scalar_select %p271, %s270, 1
          %s273 = smul.addr %s272, 8
          %s274 = scalar_lea.vmem %s4, %s273
          %s275 = sadd.s32 %s21, %s22
        $region36: #{tpu_custom_call.1} parent=15 // pred_fallthru
          _
      $region16: #{tpu_custom_call.1} parent=5 // pred_fallthru
        _
      %p276 = scmp.le.s32.totalorder 1, %s14
      %p277 = scmp.lt.s32.totalorder %s14, 3
      %p278 = pnand %p276, %p277
      %p279 = pneg %p278
      // Predicated region
      $region37: #{tpu_custom_call.1} parent=5 // pred_check
        _
      $region38: #{tpu_custom_call.1} parent=5 // pred_check_branch
        %281 = sbr.rel (%p278) target = $region40
      $region39: #{tpu_custom_call.1} parent=5 // pred_region
        %s282 = ssub.s32 %s14, 1
        %s283 = sadd.s32 %s23, %s24
        %p284 = scmp.lt.s32.totalorder %s283, 0
        %s285 = scalar_select %p284, %s283, 0
        %s286 = smul.u32 32, %s285
        %p287 = scmp.lt.s32.totalorder %s286, 31
        %s288 = scalar_select %p287, %s286, 31
        %s289 = smul.addr %s288, 8
        %s290 = scalar_lea.vmem %s0, %s289
        %p291 = pneg %p58
        %p292 = pneg %p55
        %s293 = sadd.s32 %s23, %s24
        %p294 = scmp.lt.s32.totalorder %s293, 0
        %s295 = scalar_select %p294, %s293, 0
        %s296 = smul.u32 32, %s295
        %p297 = scmp.lt.s32.totalorder %s296, 31
        %s298 = scalar_select %p297, %s296, 31
        %s299 = smul.addr %s298, 8
        %s300 = scalar_lea.vmem %s1, %s299
        %p301 = pneg %p90
        %p302 = pneg %p87
        %s303 = sadd.s32 %s23, %s24
        %p304 = scmp.lt.s32.totalorder %s303, 1
        %s305 = scalar_select %p304, %s303, 1
        %s306 = smul.addr %s305, 8
        %s307 = scalar_lea.vmem %s2, %s306
        %p308 = pneg %p118
        %p309 = pneg %p115
        %s310 = sadd.s32 %s23, %s24
        %p311 = scmp.lt.s32.totalorder %s310, 1
        %s312 = scalar_select %p311, %s310, 1
        %s313 = smul.addr %s312, 8
        %s314 = scalar_lea.vmem %s3, %s313
        %p315 = pneg %p146
        %p316 = pneg %p143
        %s317 = sadd.s32 %s23, %s24
        %p318 = scmp.lt.s32.totalorder %s317, 1
        %s319 = scalar_select %p318, %s317, 1
        %s320 = smul.addr %s319, 8
        %s321 = scalar_lea.vmem %s4, %s320
        %p322 = pneg %p174
        %p323 = pneg %p171
        %p324 = pneg %p200
        %p325 = pneg %p197
        %s326 = sand.u32 %s187, 1
        %s327 = scalar_lea.sflag [#allocation3], %s326
        %s328 = sand.u32 %s187, 1
        %s329 = smul.addr %s328, 8
        %s330 = scalar_lea.vmem [#allocation2], %s329
        %s331 = sadd.s32 %s23, %s24
        %p332 = scmp.lt.s32.totalorder %s331, 0
        %s333 = scalar_select %p332, %s331, 0
        %s334 = smul.u32 32, %s333
        %p335 = scmp.lt.s32.totalorder %s334, 31
        %s336 = scalar_select %p335, %s334, 31
        %s337 = smul.addr %s336, 8
        %s338 = scalar_lea.vmem %s0, %s337
        %s339 = sadd.s32 %s23, %s24
        %p340 = scmp.lt.s32.totalorder %s339, 0
        %s341 = scalar_select %p340, %s339, 0
        %s342 = smul.u32 32, %s341
        %s343 = sadd.s32 %s23, %s24
        %p344 = scmp.lt.s32.totalorder %s343, 0
        %s345 = scalar_select %p344, %s343, 0
        %s346 = smul.u32 32, %s345
        %p347 = scmp.lt.s32.totalorder %s346, 31
        %s348 = scalar_select %p347, %s346, 31
        %s349 = smul.addr %s348, 8
        %s350 = scalar_lea.vmem %s1, %s349
        %s351 = sadd.s32 %s23, %s24
        %p352 = scmp.lt.s32.totalorder %s351, 0
        %s353 = scalar_select %p352, %s351, 0
        %s354 = smul.u32 32, %s353
        %s355 = sadd.s32 %s23, %s24
        %p356 = scmp.lt.s32.totalorder %s355, 1
        %s357 = scalar_select %p356, %s355, 1
        %s358 = smul.addr %s357, 8
        %s359 = scalar_lea.vmem %s2, %s358
        %s360 = sadd.s32 %s23, %s24
        %s361 = sadd.s32 %s23, %s24
        %p362 = scmp.lt.s32.totalorder %s361, 1
        %s363 = scalar_select %p362, %s361, 1
        %s364 = smul.addr %s363, 8
        %s365 = scalar_lea.vmem %s3, %s364
        %s366 = sadd.s32 %s23, %s24
        %s367 = sadd.s32 %s23, %s24
        %p368 = scmp.lt.s32.totalorder %s367, 1
        %s369 = scalar_select %p368, %s367, 1
        %s370 = smul.addr %s369, 8
        %s371 = scalar_lea.vmem %s4, %s370
        %s372 = sadd.s32 %s23, %s24
        %p373 = scmp.eq.s32.totalorder %s24, 0
        // Predicated region
        $region41: #{tpu_custom_call.1} parent=39 // pred_check
          %p374 = pneg %p373
        $region42: #{tpu_custom_call.1} parent=39 // pred_check_branch
          %376 = sbr.rel (%p374) target = $region44
        $region43: #{tpu_custom_call.1} parent=39 // pred_region
          %377 = vst [vmem:[%s330] sm:$0xff] 0.0
        $region44: #{tpu_custom_call.1} parent=39 // pred_fallthru
          _
        %s378 = sadd.s32 %s23, %s24
        %s379 = smul.u32 %s378, 256
        %v380 = vlaneseq
        %v381 = vshrl.u32 %v380, 7
        %v382 = vadd.s32 %v381, 8
        %v383 = vadd.s32 %v381, 16
        %v384 = vadd.s32 %v381, 24
        %v385 = vadd.s32 %v381, 32
        %v386 = vadd.s32 %v381, 40
        %v387 = vadd.s32 %v381, 48
        %v388 = vadd.s32 %v381, 56
        %v389 = vadd.s32 %v381, 64
        %v390 = vadd.s32 %v381, 72
        %v391 = vadd.s32 %v381, 80
        %v392 = vadd.s32 %v381, 88
        %v393 = vadd.s32 %v381, 96
        %v394 = vadd.s32 %v381, 104
        %v395 = vadd.s32 %v381, 112
        %v396 = vadd.s32 %v381, 120
        %v397 = vadd.s32 %v381, 128
        %v398 = vadd.s32 %v381, 136
        %v399 = vadd.s32 %v381, 144
        %v400 = vadd.s32 %v381, 152
        %v401 = vadd.s32 %v381, 160
        %v402 = vadd.s32 %v381, 168
        %v403 = vadd.s32 %v381, 176
        %v404 = vadd.s32 %v381, 184
        %v405 = vadd.s32 %v381, 192
        %v406 = vadd.s32 %v381, 200
        %v407 = vadd.s32 %v381, 208
        %v408 = vadd.s32 %v381, 216
        %v409 = vadd.s32 %v381, 224
        %v410 = vadd.s32 %v381, 232
        %v411 = vadd.s32 %v381, 240
        %v412 = vadd.s32 %v381, 248
        %v413 = vstv %s379
        %v414 = vadd.s32 %v413, %v381
        %v415 = vadd.s32 %v413, %v382
        %v416 = vadd.s32 %v413, %v383
        %v417 = vadd.s32 %v413, %v384
        %v418 = vadd.s32 %v413, %v385
        %v419 = vadd.s32 %v413, %v386
        %v420 = vadd.s32 %v413, %v387
        %v421 = vadd.s32 %v413, %v388
        %v422 = vadd.s32 %v413, %v389
        %v423 = vadd.s32 %v413, %v390
        %v424 = vadd.s32 %v413, %v391
        %v425 = vadd.s32 %v413, %v392
        %v426 = vadd.s32 %v413, %v393
        %v427 = vadd.s32 %v413, %v394
        %v428 = vadd.s32 %v413, %v395
        %v429 = vadd.s32 %v413, %v396
        %v430 = vadd.s32 %v413, %v397
        %v431 = vadd.s32 %v413, %v398
        %v432 = vadd.s32 %v413, %v399
        %v433 = vadd.s32 %v413, %v400
        %v434 = vadd.s32 %v413, %v401
        %v435 = vadd.s32 %v413, %v402
        %v436 = vadd.s32 %v413, %v403
        %v437 = vadd.s32 %v413, %v404
        %v438 = vadd.s32 %v413, %v405
        %v439 = vadd.s32 %v413, %v406
        %v440 = vadd.s32 %v413, %v407
        %v441 = vadd.s32 %v413, %v408
        %v442 = vadd.s32 %v413, %v409
        %v443 = vadd.s32 %v413, %v410
        %v444 = vadd.s32 %v413, %v411
        %v445 = vadd.s32 %v413, %v412
        %vm446 = vcmp.lt.s32.totalorder %v414, 16
        %vm447 = vcmp.lt.s32.totalorder %v415, 16
        %vm448 = vcmp.lt.s32.totalorder %v416, 16
        %vm449 = vcmp.lt.s32.totalorder %v417, 16
        %vm450 = vcmp.lt.s32.totalorder %v418, 16
        %vm451 = vcmp.lt.s32.totalorder %v419, 16
        %vm452 = vcmp.lt.s32.totalorder %v420, 16
        %vm453 = vcmp.lt.s32.totalorder %v421, 16
        %vm454 = vcmp.lt.s32.totalorder %v422, 16
        %vm455 = vcmp.lt.s32.totalorder %v423, 16
        %vm456 = vcmp.lt.s32.totalorder %v424, 16
        %vm457 = vcmp.lt.s32.totalorder %v425, 16
        %vm458 = vcmp.lt.s32.totalorder %v426, 16
        %vm459 = vcmp.lt.s32.totalorder %v427, 16
        %vm460 = vcmp.lt.s32.totalorder %v428, 16
        %vm461 = vcmp.lt.s32.totalorder %v429, 16
        %vm462 = vcmp.lt.s32.totalorder %v430, 16
        %vm463 = vcmp.lt.s32.totalorder %v431, 16
        %vm464 = vcmp.lt.s32.totalorder %v432, 16
        %vm465 = vcmp.lt.s32.totalorder %v433, 16
        %vm466 = vcmp.lt.s32.totalorder %v434, 16
        %vm467 = vcmp.lt.s32.totalorder %v435, 16
        %vm468 = vcmp.lt.s32.totalorder %v436, 16
        %vm469 = vcmp.lt.s32.totalorder %v437, 16
        %vm470 = vcmp.lt.s32.totalorder %v438, 16
        %vm471 = vcmp.lt.s32.totalorder %v439, 16
        %vm472 = vcmp.lt.s32.totalorder %v440, 16
        %vm473 = vcmp.lt.s32.totalorder %v441, 16
        %vm474 = vcmp.lt.s32.totalorder %v442, 16
        %vm475 = vcmp.lt.s32.totalorder %v443, 16
        %vm476 = vcmp.lt.s32.totalorder %v444, 16
        %vm477 = vcmp.lt.s32.totalorder %v445, 16
        %v478 = vld [vmem:[%s338] sm:$0xff]
        %v479 = vld [vmem:[%s338 + $0x8] sm:$0xff]
        %v480 = vld [vmem:[%s338 + $0x10] sm:$0xff]
        %v481 = vld [vmem:[%s338 + $0x18] sm:$0xff]
        %v482 = vld [vmem:[%s338 + $0x20] sm:$0xff]
        %v483 = vld [vmem:[%s338 + $0x28] sm:$0xff]
        %v484 = vld [vmem:[%s338 + $0x30] sm:$0xff]
        %v485 = vld [vmem:[%s338 + $0x38] sm:$0xff]
        %v486 = vld [vmem:[%s338 + $0x40] sm:$0xff]
        %v487 = vld [vmem:[%s338 + $0x48] sm:$0xff]
        %v488 = vld [vmem:[%s338 + $0x50] sm:$0xff]
        %v489 = vld [vmem:[%s338 + $0x58] sm:$0xff]
        %v490 = vld [vmem:[%s338 + $0x60] sm:$0xff]
        %v491 = vld [vmem:[%s338 + $0x68] sm:$0xff]
        %v492 = vld [vmem:[%s338 + $0x70] sm:$0xff]
        %v493 = vld [vmem:[%s338 + $0x78] sm:$0xff]
        %v494 = vld [vmem:[%s338 + $0x80] sm:$0xff]
        %v495 = vld [vmem:[%s338 + $0x88] sm:$0xff]
        %v496 = vld [vmem:[%s338 + $0x90] sm:$0xff]
        %v497 = vld [vmem:[%s338 + $0x98] sm:$0xff]
        %v498 = vld [vmem:[%s338 + $0xa0] sm:$0xff]
        %v499 = vld [vmem:[%s338 + $0xa8] sm:$0xff]
        %v500 = vld [vmem:[%s338 + $0xb0] sm:$0xff]
        %v501 = vld [vmem:[%s338 + $0xb8] sm:$0xff]
        %v502 = vld [vmem:[%s338 + $0xc0] sm:$0xff]
        %v503 = vld [vmem:[%s338 + $0xc8] sm:$0xff]
        %v504 = vld [vmem:[%s338 + $0xd0] sm:$0xff]
        %v505 = vld [vmem:[%s338 + $0xd8] sm:$0xff]
        %v506 = vld [vmem:[%s338 + $0xe0] sm:$0xff]
        %v507 = vld [vmem:[%s338 + $0xe8] sm:$0xff]
        %v508 = vld [vmem:[%s338 + $0xf0] sm:$0xff]
        %v509 = vld [vmem:[%s338 + $0xf8] sm:$0xff]
        %vm510 = vcmask 261120
        %v511 = vsel %vm510, %v478, -inf
        %512 = vmax.xlane.f32.xlu0 %v511
        %v513 = vpop.xlane.xlu0 %512
        %v514 = vsel %vm510, %v479, -inf
        %515 = vmax.xlane.f32.xlu0 %v514
        %v516 = vpop.xlane.xlu0 %515
        %v517 = vsel %vm510, %v480, -inf
        %518 = vmax.xlane.f32.xlu0 %v517
        %v519 = vpop.xlane.xlu0 %518
        %v520 = vsel %vm510, %v481, -inf
        %521 = vmax.xlane.f32.xlu0 %v520
        %v522 = vpop.xlane.xlu0 %521
        %v523 = vsel %vm510, %v482, -inf
        %524 = vmax.xlane.f32.xlu0 %v523
        %v525 = vpop.xlane.xlu0 %524
        %v526 = vsel %vm510, %v483, -inf
        %527 = vmax.xlane.f32.xlu0 %v526
        %v528 = vpop.xlane.xlu0 %527
        %v529 = vsel %vm510, %v484, -inf
        %530 = vmax.xlane.f32.xlu0 %v529
        %v531 = vpop.xlane.xlu0 %530
        %v532 = vsel %vm510, %v485, -inf
        %533 = vmax.xlane.f32.xlu0 %v532
        %v534 = vpop.xlane.xlu0 %533
        %v535 = vsel %vm510, %v486, -inf
        %536 = vmax.xlane.f32.xlu0 %v535
        %v537 = vpop.xlane.xlu0 %536
        %v538 = vsel %vm510, %v487, -inf
        %539 = vmax.xlane.f32.xlu0 %v538
        %v540 = vpop.xlane.xlu0 %539
        %v541 = vsel %vm510, %v488, -inf
        %542 = vmax.xlane.f32.xlu0 %v541
        %v543 = vpop.xlane.xlu0 %542
        %v544 = vsel %vm510, %v489, -inf
        %545 = vmax.xlane.f32.xlu0 %v544
        %v546 = vpop.xlane.xlu0 %545
        %v547 = vsel %vm510, %v490, -inf
        %548 = vmax.xlane.f32.xlu0 %v547
        %v549 = vpop.xlane.xlu0 %548
        %v550 = vsel %vm510, %v491, -inf
        %551 = vmax.xlane.f32.xlu0 %v550
        %v552 = vpop.xlane.xlu0 %551
        %v553 = vsel %vm510, %v492, -inf
        %554 = vmax.xlane.f32.xlu0 %v553
        %v555 = vpop.xlane.xlu0 %554
        %v556 = vsel %vm510, %v493, -inf
        %557 = vmax.xlane.f32.xlu0 %v556
        %v558 = vpop.xlane.xlu0 %557
        %v559 = vsel %vm510, %v494, -inf
        %560 = vmax.xlane.f32.xlu0 %v559
        %v561 = vpop.xlane.xlu0 %560
        %v562 = vsel %vm510, %v495, -inf
        %563 = vmax.xlane.f32.xlu0 %v562
        %v564 = vpop.xlane.xlu0 %563
        %v565 = vsel %vm510, %v496, -inf
        %566 = vmax.xlane.f32.xlu0 %v565
        %v567 = vpop.xlane.xlu0 %566
        %v568 = vsel %vm510, %v497, -inf
        %569 = vmax.xlane.f32.xlu0 %v568
        %v570 = vpop.xlane.xlu0 %569
        %v571 = vsel %vm510, %v498, -inf
        %572 = vmax.xlane.f32.xlu0 %v571
        %v573 = vpop.xlane.xlu0 %572
        %v574 = vsel %vm510, %v499, -inf
        %575 = vmax.xlane.f32.xlu0 %v574
        %v576 = vpop.xlane.xlu0 %575
        %v577 = vsel %vm510, %v500, -inf
        %578 = vmax.xlane.f32.xlu0 %v577
        %v579 = vpop.xlane.xlu0 %578
        %v580 = vsel %vm510, %v501, -inf
        %581 = vmax.xlane.f32.xlu0 %v580
        %v582 = vpop.xlane.xlu0 %581
        %v583 = vsel %vm510, %v502, -inf
        %584 = vmax.xlane.f32.xlu0 %v583
        %v585 = vpop.xlane.xlu0 %584
        %v586 = vsel %vm510, %v503, -inf
        %587 = vmax.xlane.f32.xlu0 %v586
        %v588 = vpop.xlane.xlu0 %587
        %v589 = vsel %vm510, %v504, -inf
        %590 = vmax.xlane.f32.xlu0 %v589
        %v591 = vpop.xlane.xlu0 %590
        %v592 = vsel %vm510, %v505, -inf
        %593 = vmax.xlane.f32.xlu0 %v592
        %v594 = vpop.xlane.xlu0 %593
        %v595 = vsel %vm510, %v506, -inf
        %596 = vmax.xlane.f32.xlu0 %v595
        %v597 = vpop.xlane.xlu0 %596
        %v598 = vsel %vm510, %v507, -inf
        %599 = vmax.xlane.f32.xlu0 %v598
        %v600 = vpop.xlane.xlu0 %599
        %v601 = vsel %vm510, %v508, -inf
        %602 = vmax.xlane.f32.xlu0 %v601
        %v603 = vpop.xlane.xlu0 %602
        %v604 = vsel %vm510, %v509, -inf
        %605 = vmax.xlane.f32.xlu0 %v604
        %v606 = vpop.xlane.xlu0 %605
        %v607 = vsub.f32 %v478, %v513
        %v608 = vsub.f32 %v479, %v516
        %v609 = vsub.f32 %v480, %v519
        %v610 = vsub.f32 %v481, %v522
        %v611 = vsub.f32 %v482, %v525
        %v612 = vsub.f32 %v483, %v528
        %v613 = vsub.f32 %v484, %v531
        %v614 = vsub.f32 %v485, %v534
        %v615 = vsub.f32 %v486, %v537
        %v616 = vsub.f32 %v487, %v540
        %v617 = vsub.f32 %v488, %v543
        %v618 = vsub.f32 %v489, %v546
        %v619 = vsub.f32 %v490, %v549
        %v620 = vsub.f32 %v491, %v552
        %v621 = vsub.f32 %v492, %v555
        %v622 = vsub.f32 %v493, %v558
        %v623 = vsub.f32 %v494, %v561
        %v624 = vsub.f32 %v495, %v564
        %v625 = vsub.f32 %v496, %v567
        %v626 = vsub.f32 %v497, %v570
        %v627 = vsub.f32 %v498, %v573
        %v628 = vsub.f32 %v499, %v576
        %v629 = vsub.f32 %v500, %v579
        %v630 = vsub.f32 %v501, %v582
        %v631 = vsub.f32 %v502, %v585
        %v632 = vsub.f32 %v503, %v588
        %v633 = vsub.f32 %v504, %v591
        %v634 = vsub.f32 %v505, %v594
        %v635 = vsub.f32 %v506, %v597
        %v636 = vsub.f32 %v507, %v600
        %v637 = vsub.f32 %v508, %v603
        %v638 = vsub.f32 %v509, %v606
        %v639 = vmul.f32 %v607, 1.442695
        %v640 = vpow.pop %v639
        %v641 = vmul.f32 %v608, 1.442695
        %v642 = vpow.pop %v641
        %v643 = vmul.f32 %v609, 1.442695
        %v644 = vpow.pop %v643
        %v645 = vmul.f32 %v610, 1.442695
        %v646 = vpow.pop %v645
        %v647 = vmul.f32 %v611, 1.442695
        %v648 = vpow.pop %v647
        %v649 = vmul.f32 %v612, 1.442695
        %v650 = vpow.pop %v649
        %v651 = vmul.f32 %v613, 1.442695
        %v652 = vpow.pop %v651
        %v653 = vmul.f32 %v614, 1.442695
        %v654 = vpow.pop %v653
        %v655 = vmul.f32 %v615, 1.442695
        %v656 = vpow.pop %v655
        %v657 = vmul.f32 %v616, 1.442695
        %v658 = vpow.pop %v657
        %v659 = vmul.f32 %v617, 1.442695
        %v660 = vpow.pop %v659
        %v661 = vmul.f32 %v618, 1.442695
        %v662 = vpow.pop %v661
        %v663 = vmul.f32 %v619, 1.442695
        %v664 = vpow.pop %v663
        %v665 = vmul.f32 %v620, 1.442695
        %v666 = vpow.pop %v665
        %v667 = vmul.f32 %v621, 1.442695
        %v668 = vpow.pop %v667
        %v669 = vmul.f32 %v622, 1.442695
        %v670 = vpow.pop %v669
        %v671 = vmul.f32 %v623, 1.442695
        %v672 = vpow.pop %v671
        %v673 = vmul.f32 %v624, 1.442695
        %v674 = vpow.pop %v673
        %v675 = vmul.f32 %v625, 1.442695
        %v676 = vpow.pop %v675
        %v677 = vmul.f32 %v626, 1.442695
        %v678 = vpow.pop %v677
        %v679 = vmul.f32 %v627, 1.442695
        %v680 = vpow.pop %v679
        %v681 = vmul.f32 %v628, 1.442695
        %v682 = vpow.pop %v681
        %v683 = vmul.f32 %v629, 1.442695
        %v684 = vpow.pop %v683
        %v685 = vmul.f32 %v630, 1.442695
        %v686 = vpow.pop %v685
        %v687 = vmul.f32 %v631, 1.442695
        %v688 = vpow.pop %v687
        %v689 = vmul.f32 %v632, 1.442695
        %v690 = vpow.pop %v689
        %v691 = vmul.f32 %v633, 1.442695
        %v692 = vpow.pop %v691
        %v693 = vmul.f32 %v634, 1.442695
        %v694 = vpow.pop %v693
        %v695 = vmul.f32 %v635, 1.442695
        %v696 = vpow.pop %v695
        %v697 = vmul.f32 %v636, 1.442695
        %v698 = vpow.pop %v697
        %v699 = vmul.f32 %v637, 1.442695
        %v700 = vpow.pop %v699
        %v701 = vmul.f32 %v638, 1.442695
        %v702 = vpow.pop %v701
        %v703 = vsel %vm510, %v640, 0.0
        %704 = vadd.xlane.f32.xlu0 %v703
        %v705 = vpop.xlane.xlu0 %704
        %v706 = vsel %vm510, %v642, 0.0
        %707 = vadd.xlane.f32.xlu0 %v706
        %v708 = vpop.xlane.xlu0 %707
        %v709 = vsel %vm510, %v644, 0.0
        %710 = vadd.xlane.f32.xlu0 %v709
        %v711 = vpop.xlane.xlu0 %710
        %v712 = vsel %vm510, %v646, 0.0
        %713 = vadd.xlane.f32.xlu0 %v712
        %v714 = vpop.xlane.xlu0 %713
        %v715 = vsel %vm510, %v648, 0.0
        %716 = vadd.xlane.f32.xlu0 %v715
        %v717 = vpop.xlane.xlu0 %716
        %v718 = vsel %vm510, %v650, 0.0
        %719 = vadd.xlane.f32.xlu0 %v718
        %v720 = vpop.xlane.xlu0 %719
        %v721 = vsel %vm510, %v652, 0.0
        %722 = vadd.xlane.f32.xlu0 %v721
        %v723 = vpop.xlane.xlu0 %722
        %v724 = vsel %vm510, %v654, 0.0
        %725 = vadd.xlane.f32.xlu0 %v724
        %v726 = vpop.xlane.xlu0 %725
        %v727 = vsel %vm510, %v656, 0.0
        %728 = vadd.xlane.f32.xlu0 %v727
        %v729 = vpop.xlane.xlu0 %728
        %v730 = vsel %vm510, %v658, 0.0
        %731 = vadd.xlane.f32.xlu0 %v730
        %v732 = vpop.xlane.xlu0 %731
        %v733 = vsel %vm510, %v660, 0.0
        %734 = vadd.xlane.f32.xlu0 %v733
        %v735 = vpop.xlane.xlu0 %734
        %v736 = vsel %vm510, %v662, 0.0
        %737 = vadd.xlane.f32.xlu0 %v736
        %v738 = vpop.xlane.xlu0 %737
        %v739 = vsel %vm510, %v664, 0.0
        %740 = vadd.xlane.f32.xlu0 %v739
        %v741 = vpop.xlane.xlu0 %740
        %v742 = vsel %vm510, %v666, 0.0
        %743 = vadd.xlane.f32.xlu0 %v742
        %v744 = vpop.xlane.xlu0 %743
        %v745 = vsel %vm510, %v668, 0.0
        %746 = vadd.xlane.f32.xlu0 %v745
        %v747 = vpop.xlane.xlu0 %746
        %v748 = vsel %vm510, %v670, 0.0
        %749 = vadd.xlane.f32.xlu0 %v748
        %v750 = vpop.xlane.xlu0 %749
        %v751 = vsel %vm510, %v672, 0.0
        %752 = vadd.xlane.f32.xlu0 %v751
        %v753 = vpop.xlane.xlu0 %752
        %v754 = vsel %vm510, %v674, 0.0
        %755 = vadd.xlane.f32.xlu0 %v754
        %v756 = vpop.xlane.xlu0 %755
        %v757 = vsel %vm510, %v676, 0.0
        %758 = vadd.xlane.f32.xlu0 %v757
        %v759 = vpop.xlane.xlu0 %758
        %v760 = vsel %vm510, %v678, 0.0
        %761 = vadd.xlane.f32.xlu0 %v760
        %v762 = vpop.xlane.xlu0 %761
        %v763 = vsel %vm510, %v680, 0.0
        %764 = vadd.xlane.f32.xlu0 %v763
        %v765 = vpop.xlane.xlu0 %764
        %v766 = vsel %vm510, %v682, 0.0
        %767 = vadd.xlane.f32.xlu0 %v766
        %v768 = vpop.xlane.xlu0 %767
        %v769 = vsel %vm510, %v684, 0.0
        %770 = vadd.xlane.f32.xlu0 %v769
        %v771 = vpop.xlane.xlu0 %770
        %v772 = vsel %vm510, %v686, 0.0
        %773 = vadd.xlane.f32.xlu0 %v772
        %v774 = vpop.xlane.xlu0 %773
        %v775 = vsel %vm510, %v688, 0.0
        %776 = vadd.xlane.f32.xlu0 %v775
        %v777 = vpop.xlane.xlu0 %776
        %v778 = vsel %vm510, %v690, 0.0
        %779 = vadd.xlane.f32.xlu0 %v778
        %v780 = vpop.xlane.xlu0 %779
        %v781 = vsel %vm510, %v692, 0.0
        %782 = vadd.xlane.f32.xlu0 %v781
        %v783 = vpop.xlane.xlu0 %782
        %v784 = vsel %vm510, %v694, 0.0
        %785 = vadd.xlane.f32.xlu0 %v784
        %v786 = vpop.xlane.xlu0 %785
        %v787 = vsel %vm510, %v696, 0.0
        %788 = vadd.xlane.f32.xlu0 %v787
        %v789 = vpop.xlane.xlu0 %788
        %v790 = vsel %vm510, %v698, 0.0
        %791 = vadd.xlane.f32.xlu0 %v790
        %v792 = vpop.xlane.xlu0 %791
        %v793 = vsel %vm510, %v700, 0.0
        %794 = vadd.xlane.f32.xlu0 %v793
        %v795 = vpop.xlane.xlu0 %794
        %v796 = vsel %vm510, %v702, 0.0
        %797 = vadd.xlane.f32.xlu0 %v796
        %v798 = vpop.xlane.xlu0 %797
        %v799 = vlog2.pop %v705
        %v800 = vmul.f32 %v799, 0.6931472
        %v801 = vlog2.pop %v708
        %v802 = vmul.f32 %v801, 0.6931472
        %v803 = vlog2.pop %v711
        %v804 = vmul.f32 %v803, 0.6931472
        %v805 = vlog2.pop %v714
        %v806 = vmul.f32 %v805, 0.6931472
        %v807 = vlog2.pop %v717
        %v808 = vmul.f32 %v807, 0.6931472
        %v809 = vlog2.pop %v720
        %v810 = vmul.f32 %v809, 0.6931472
        %v811 = vlog2.pop %v723
        %v812 = vmul.f32 %v811, 0.6931472
        %v813 = vlog2.pop %v726
        %v814 = vmul.f32 %v813, 0.6931472
        %v815 = vlog2.pop %v729
        %v816 = vmul.f32 %v815, 0.6931472
        %v817 = vlog2.pop %v732
        %v818 = vmul.f32 %v817, 0.6931472
        %v819 = vlog2.pop %v735
        %v820 = vmul.f32 %v819, 0.6931472
        %v821 = vlog2.pop %v738
        %v822 = vmul.f32 %v821, 0.6931472
        %v823 = vlog2.pop %v741
        %v824 = vmul.f32 %v823, 0.6931472
        %v825 = vlog2.pop %v744
        %v826 = vmul.f32 %v825, 0.6931472
        %v827 = vlog2.pop %v747
        %v828 = vmul.f32 %v827, 0.6931472
        %v829 = vlog2.pop %v750
        %v830 = vmul.f32 %v829, 0.6931472
        %v831 = vlog2.pop %v753
        %v832 = vmul.f32 %v831, 0.6931472
        %v833 = vlog2.pop %v756
        %v834 = vmul.f32 %v833, 0.6931472
        %v835 = vlog2.pop %v759
        %v836 = vmul.f32 %v835, 0.6931472
        %v837 = vlog2.pop %v762
        %v838 = vmul.f32 %v837, 0.6931472
        %v839 = vlog2.pop %v765
        %v840 = vmul.f32 %v839, 0.6931472
        %v841 = vlog2.pop %v768
        %v842 = vmul.f32 %v841, 0.6931472
        %v843 = vlog2.pop %v771
        %v844 = vmul.f32 %v843, 0.6931472
        %v845 = vlog2.pop %v774
        %v846 = vmul.f32 %v845, 0.6931472
        %v847 = vlog2.pop %v777
        %v848 = vmul.f32 %v847, 0.6931472
        %v849 = vlog2.pop %v780
        %v850 = vmul.f32 %v849, 0.6931472
        %v851 = vlog2.pop %v783
        %v852 = vmul.f32 %v851, 0.6931472
        %v853 = vlog2.pop %v786
        %v854 = vmul.f32 %v853, 0.6931472
        %v855 = vlog2.pop %v789
        %v856 = vmul.f32 %v855, 0.6931472
        %v857 = vlog2.pop %v792
        %v858 = vmul.f32 %v857, 0.6931472
        %v859 = vlog2.pop %v795
        %v860 = vmul.f32 %v859, 0.6931472
        %v861 = vlog2.pop %v798
        %v862 = vmul.f32 %v861, 0.6931472
        %v863 = vadd.f32 %v800, %v513
        %v864 = vadd.f32 %v802, %v516
        %v865 = vadd.f32 %v804, %v519
        %v866 = vadd.f32 %v806, %v522
        %v867 = vadd.f32 %v808, %v525
        %v868 = vadd.f32 %v810, %v528
        %v869 = vadd.f32 %v812, %v531
        %v870 = vadd.f32 %v814, %v534
        %v871 = vadd.f32 %v816, %v537
        %v872 = vadd.f32 %v818, %v540
        %v873 = vadd.f32 %v820, %v543
        %v874 = vadd.f32 %v822, %v546
        %v875 = vadd.f32 %v824, %v549
        %v876 = vadd.f32 %v826, %v552
        %v877 = vadd.f32 %v828, %v555
        %v878 = vadd.f32 %v830, %v558
        %v879 = vadd.f32 %v832, %v561
        %v880 = vadd.f32 %v834, %v564
        %v881 = vadd.f32 %v836, %v567
        %v882 = vadd.f32 %v838, %v570
        %v883 = vadd.f32 %v840, %v573
        %v884 = vadd.f32 %v842, %v576
        %v885 = vadd.f32 %v844, %v579
        %v886 = vadd.f32 %v846, %v582
        %v887 = vadd.f32 %v848, %v585
        %v888 = vadd.f32 %v850, %v588
        %v889 = vadd.f32 %v852, %v591
        %v890 = vadd.f32 %v854, %v594
        %v891 = vadd.f32 %v856, %v597
        %v892 = vadd.f32 %v858, %v600
        %v893 = vadd.f32 %v860, %v603
        %v894 = vadd.f32 %v862, %v606
        %v895 = vlaneseq
        %v896 = vand.u32 %v895, 127
        %v897 = vld [vmem:[%s350] sm:$0xff]
        %v898 = vld [vmem:[%s350 + $0x8] sm:$0xff]
        %v899 = vld [vmem:[%s350 + $0x10] sm:$0xff]
        %v900 = vld [vmem:[%s350 + $0x18] sm:$0xff]
        %v901 = vld [vmem:[%s350 + $0x20] sm:$0xff]
        %v902 = vld [vmem:[%s350 + $0x28] sm:$0xff]
        %v903 = vld [vmem:[%s350 + $0x30] sm:$0xff]
        %v904 = vld [vmem:[%s350 + $0x38] sm:$0xff]
        %v905 = vld [vmem:[%s350 + $0x40] sm:$0xff]
        %v906 = vld [vmem:[%s350 + $0x48] sm:$0xff]
        %v907 = vld [vmem:[%s350 + $0x50] sm:$0xff]
        %v908 = vld [vmem:[%s350 + $0x58] sm:$0xff]
        %v909 = vld [vmem:[%s350 + $0x60] sm:$0xff]
        %v910 = vld [vmem:[%s350 + $0x68] sm:$0xff]
        %v911 = vld [vmem:[%s350 + $0x70] sm:$0xff]
        %v912 = vld [vmem:[%s350 + $0x78] sm:$0xff]
        %v913 = vld [vmem:[%s350 + $0x80] sm:$0xff]
        %v914 = vld [vmem:[%s350 + $0x88] sm:$0xff]
        %v915 = vld [vmem:[%s350 + $0x90] sm:$0xff]
        %v916 = vld [vmem:[%s350 + $0x98] sm:$0xff]
        %v917 = vld [vmem:[%s350 + $0xa0] sm:$0xff]
        %v918 = vld [vmem:[%s350 + $0xa8] sm:$0xff]
        %v919 = vld [vmem:[%s350 + $0xb0] sm:$0xff]
        %v920 = vld [vmem:[%s350 + $0xb8] sm:$0xff]
        %v921 = vld [vmem:[%s350 + $0xc0] sm:$0xff]
        %v922 = vld [vmem:[%s350 + $0xc8] sm:$0xff]
        %v923 = vld [vmem:[%s350 + $0xd0] sm:$0xff]
        %v924 = vld [vmem:[%s350 + $0xd8] sm:$0xff]
        %v925 = vld [vmem:[%s350 + $0xe0] sm:$0xff]
        %v926 = vld [vmem:[%s350 + $0xe8] sm:$0xff]
        %v927 = vld [vmem:[%s350 + $0xf0] sm:$0xff]
        %v928 = vld [vmem:[%s350 + $0xf8] sm:$0xff]
        %929 = vset.pattern.permute.xlu0 0
        %930 = vperm.xlu0 %929, %v897
        %v931 = vpop.permute.xlu0 %930
        %932 = vset.pattern.permute.xlu0 0
        %933 = vperm.xlu0 %932, %v898
        %v934 = vpop.permute.xlu0 %933
        %935 = vset.pattern.permute.xlu0 0
        %936 = vperm.xlu0 %935, %v899
        %v937 = vpop.permute.xlu0 %936
        %938 = vset.pattern.permute.xlu0 0
        %939 = vperm.xlu0 %938, %v900
        %v940 = vpop.permute.xlu0 %939
        %941 = vset.pattern.permute.xlu0 0
        %942 = vperm.xlu0 %941, %v901
        %v943 = vpop.permute.xlu0 %942
        %944 = vset.pattern.permute.xlu0 0
        %945 = vperm.xlu0 %944, %v902
        %v946 = vpop.permute.xlu0 %945
        %947 = vset.pattern.permute.xlu0 0
        %948 = vperm.xlu0 %947, %v903
        %v949 = vpop.permute.xlu0 %948
        %950 = vset.pattern.permute.xlu0 0
        %951 = vperm.xlu0 %950, %v904
        %v952 = vpop.permute.xlu0 %951
        %953 = vset.pattern.permute.xlu0 0
        %954 = vperm.xlu0 %953, %v905
        %v955 = vpop.permute.xlu0 %954
        %956 = vset.pattern.permute.xlu0 0
        %957 = vperm.xlu0 %956, %v906
        %v958 = vpop.permute.xlu0 %957
        %959 = vset.pattern.permute.xlu0 0
        %960 = vperm.xlu0 %959, %v907
        %v961 = vpop.permute.xlu0 %960
        %962 = vset.pattern.permute.xlu0 0
        %963 = vperm.xlu0 %962, %v908
        %v964 = vpop.permute.xlu0 %963
        %965 = vset.pattern.permute.xlu0 0
        %966 = vperm.xlu0 %965, %v909
        %v967 = vpop.permute.xlu0 %966
        %968 = vset.pattern.permute.xlu0 0
        %969 = vperm.xlu0 %968, %v910
        %v970 = vpop.permute.xlu0 %969
        %971 = vset.pattern.permute.xlu0 0
        %972 = vperm.xlu0 %971, %v911
        %v973 = vpop.permute.xlu0 %972
        %974 = vset.pattern.permute.xlu0 0
        %975 = vperm.xlu0 %974, %v912
        %v976 = vpop.permute.xlu0 %975
        %977 = vset.pattern.permute.xlu0 0
        %978 = vperm.xlu0 %977, %v913
        %v979 = vpop.permute.xlu0 %978
        %980 = vset.pattern.permute.xlu0 0
        %981 = vperm.xlu0 %980, %v914
        %v982 = vpop.permute.xlu0 %981
        %983 = vset.pattern.permute.xlu0 0
        %984 = vperm.xlu0 %983, %v915
        %v985 = vpop.permute.xlu0 %984
        %986 = vset.pattern.permute.xlu0 0
        %987 = vperm.xlu0 %986, %v916
        %v988 = vpop.permute.xlu0 %987
        %989 = vset.pattern.permute.xlu0 0
        %990 = vperm.xlu0 %989, %v917
        %v991 = vpop.permute.xlu0 %990
        %992 = vset.pattern.permute.xlu0 0
        %993 = vperm.xlu0 %992, %v918
        %v994 = vpop.permute.xlu0 %993
        %995 = vset.pattern.permute.xlu0 0
        %996 = vperm.xlu0 %995, %v919
        %v997 = vpop.permute.xlu0 %996
        %998 = vset.pattern.permute.xlu0 0
        %999 = vperm.xlu0 %998, %v920
        %v1000 = vpop.permute.xlu0 %999
        %1001 = vset.pattern.permute.xlu0 0
        %1002 = vperm.xlu0 %1001, %v921
        %v1003 = vpop.permute.xlu0 %1002
        %1004 = vset.pattern.permute.xlu0 0
        %1005 = vperm.xlu0 %1004, %v922
        %v1006 = vpop.permute.xlu0 %1005
        %1007 = vset.pattern.permute.xlu0 0
        %1008 = vperm.xlu0 %1007, %v923
        %v1009 = vpop.permute.xlu0 %1008
        %1010 = vset.pattern.permute.xlu0 0
        %1011 = vperm.xlu0 %1010, %v924
        %v1012 = vpop.permute.xlu0 %1011
        %1013 = vset.pattern.permute.xlu0 0
        %1014 = vperm.xlu0 %1013, %v925
        %v1015 = vpop.permute.xlu0 %1014
        %1016 = vset.pattern.permute.xlu0 0
        %1017 = vperm.xlu0 %1016, %v926
        %v1018 = vpop.permute.xlu0 %1017
        %1019 = vset.pattern.permute.xlu0 0
        %1020 = vperm.xlu0 %1019, %v927
        %v1021 = vpop.permute.xlu0 %1020
        %1022 = vset.pattern.permute.xlu0 0
        %1023 = vperm.xlu0 %1022, %v928
        %v1024 = vpop.permute.xlu0 %1023
        %vm1025 = vcmp.eq.s32.totalorder %v896, %v931
        %vm1026 = vcmp.eq.s32.totalorder %v896, %v934
        %vm1027 = vcmp.eq.s32.totalorder %v896, %v937
        %vm1028 = vcmp.eq.s32.totalorder %v896, %v940
        %vm1029 = vcmp.eq.s32.totalorder %v896, %v943
        %vm1030 = vcmp.eq.s32.totalorder %v896, %v946
        %vm1031 = vcmp.eq.s32.totalorder %v896, %v949
        %vm1032 = vcmp.eq.s32.totalorder %v896, %v952
        %vm1033 = vcmp.eq.s32.totalorder %v896, %v955
        %vm1034 = vcmp.eq.s32.totalorder %v896, %v958
        %vm1035 = vcmp.eq.s32.totalorder %v896, %v961
        %vm1036 = vcmp.eq.s32.totalorder %v896, %v964
        %vm1037 = vcmp.eq.s32.totalorder %v896, %v967
        %vm1038 = vcmp.eq.s32.totalorder %v896, %v970
        %vm1039 = vcmp.eq.s32.totalorder %v896, %v973
        %vm1040 = vcmp.eq.s32.totalorder %v896, %v976
        %vm1041 = vcmp.eq.s32.totalorder %v896, %v979
        %vm1042 = vcmp.eq.s32.totalorder %v896, %v982
        %vm1043 = vcmp.eq.s32.totalorder %v896, %v985
        %vm1044 = vcmp.eq.s32.totalorder %v896, %v988
        %vm1045 = vcmp.eq.s32.totalorder %v896, %v991
        %vm1046 = vcmp.eq.s32.totalorder %v896, %v994
        %vm1047 = vcmp.eq.s32.totalorder %v896, %v997
        %vm1048 = vcmp.eq.s32.totalorder %v896, %v1000
        %vm1049 = vcmp.eq.s32.totalorder %v896, %v1003
        %vm1050 = vcmp.eq.s32.totalorder %v896, %v1006
        %vm1051 = vcmp.eq.s32.totalorder %v896, %v1009
        %vm1052 = vcmp.eq.s32.totalorder %v896, %v1012
        %vm1053 = vcmp.eq.s32.totalorder %v896, %v1015
        %vm1054 = vcmp.eq.s32.totalorder %v896, %v1018
        %vm1055 = vcmp.eq.s32.totalorder %v896, %v1021
        %vm1056 = vcmp.eq.s32.totalorder %v896, %v1024
        %v1057 = vsel %vm1025, %v478, 0.0
        %v1058 = vsel %vm1026, %v479, 0.0
        %v1059 = vsel %vm1027, %v480, 0.0
        %v1060 = vsel %vm1028, %v481, 0.0
        %v1061 = vsel %vm1029, %v482, 0.0
        %v1062 = vsel %vm1030, %v483, 0.0
        %v1063 = vsel %vm1031, %v484, 0.0
        %v1064 = vsel %vm1032, %v485, 0.0
        %v1065 = vsel %vm1033, %v486, 0.0
        %v1066 = vsel %vm1034, %v487, 0.0
        %v1067 = vsel %vm1035, %v488, 0.0
        %v1068 = vsel %vm1036, %v489, 0.0
        %v1069 = vsel %vm1037, %v490, 0.0
        %v1070 = vsel %vm1038, %v491, 0.0
        %v1071 = vsel %vm1039, %v492, 0.0
        %v1072 = vsel %vm1040, %v493, 0.0
        %v1073 = vsel %vm1041, %v494, 0.0
        %v1074 = vsel %vm1042, %v495, 0.0
        %v1075 = vsel %vm1043, %v496, 0.0
        %v1076 = vsel %vm1044, %v497, 0.0
        %v1077 = vsel %vm1045, %v498, 0.0
        %v1078 = vsel %vm1046, %v499, 0.0
        %v1079 = vsel %vm1047, %v500, 0.0
        %v1080 = vsel %vm1048, %v501, 0.0
        %v1081 = vsel %vm1049, %v502, 0.0
        %v1082 = vsel %vm1050, %v503, 0.0
        %v1083 = vsel %vm1051, %v504, 0.0
        %v1084 = vsel %vm1052, %v505, 0.0
        %v1085 = vsel %vm1053, %v506, 0.0
        %v1086 = vsel %vm1054, %v507, 0.0
        %v1087 = vsel %vm1055, %v508, 0.0
        %v1088 = vsel %vm1056, %v509, 0.0
        %v1089 = vsel %vm510, %v1057, 0.0
        %1090 = vadd.xlane.f32.xlu0 %v1089
        %v1091 = vpop.xlane.xlu0 %1090
        %v1092 = vsel %vm510, %v1058, 0.0
        %1093 = vadd.xlane.f32.xlu0 %v1092
        %v1094 = vpop.xlane.xlu0 %1093
        %v1095 = vsel %vm510, %v1059, 0.0
        %1096 = vadd.xlane.f32.xlu0 %v1095
        %v1097 = vpop.xlane.xlu0 %1096
        %v1098 = vsel %vm510, %v1060, 0.0
        %1099 = vadd.xlane.f32.xlu0 %v1098
        %v1100 = vpop.xlane.xlu0 %1099
        %v1101 = vsel %vm510, %v1061, 0.0
        %1102 = vadd.xlane.f32.xlu0 %v1101
        %v1103 = vpop.xlane.xlu0 %1102
        %v1104 = vsel %vm510, %v1062, 0.0
        %1105 = vadd.xlane.f32.xlu0 %v1104
        %v1106 = vpop.xlane.xlu0 %1105
        %v1107 = vsel %vm510, %v1063, 0.0
        %1108 = vadd.xlane.f32.xlu0 %v1107
        %v1109 = vpop.xlane.xlu0 %1108
        %v1110 = vsel %vm510, %v1064, 0.0
        %1111 = vadd.xlane.f32.xlu0 %v1110
        %v1112 = vpop.xlane.xlu0 %1111
        %v1113 = vsel %vm510, %v1065, 0.0
        %1114 = vadd.xlane.f32.xlu0 %v1113
        %v1115 = vpop.xlane.xlu0 %1114
        %v1116 = vsel %vm510, %v1066, 0.0
        %1117 = vadd.xlane.f32.xlu0 %v1116
        %v1118 = vpop.xlane.xlu0 %1117
        %v1119 = vsel %vm510, %v1067, 0.0
        %1120 = vadd.xlane.f32.xlu0 %v1119
        %v1121 = vpop.xlane.xlu0 %1120
        %v1122 = vsel %vm510, %v1068, 0.0
        %1123 = vadd.xlane.f32.xlu0 %v1122
        %v1124 = vpop.xlane.xlu0 %1123
        %v1125 = vsel %vm510, %v1069, 0.0
        %1126 = vadd.xlane.f32.xlu0 %v1125
        %v1127 = vpop.xlane.xlu0 %1126
        %v1128 = vsel %vm510, %v1070, 0.0
        %1129 = vadd.xlane.f32.xlu0 %v1128
        %v1130 = vpop.xlane.xlu0 %1129
        %v1131 = vsel %vm510, %v1071, 0.0
        %1132 = vadd.xlane.f32.xlu0 %v1131
        %v1133 = vpop.xlane.xlu0 %1132
        %v1134 = vsel %vm510, %v1072, 0.0
        %1135 = vadd.xlane.f32.xlu0 %v1134
        %v1136 = vpop.xlane.xlu0 %1135
        %v1137 = vsel %vm510, %v1073, 0.0
        %1138 = vadd.xlane.f32.xlu0 %v1137
        %v1139 = vpop.xlane.xlu0 %1138
        %v1140 = vsel %vm510, %v1074, 0.0
        %1141 = vadd.xlane.f32.xlu0 %v1140
        %v1142 = vpop.xlane.xlu0 %1141
        %v1143 = vsel %vm510, %v1075, 0.0
        %1144 = vadd.xlane.f32.xlu0 %v1143
        %v1145 = vpop.xlane.xlu0 %1144
        %v1146 = vsel %vm510, %v1076, 0.0
        %1147 = vadd.xlane.f32.xlu0 %v1146
        %v1148 = vpop.xlane.xlu0 %1147
        %v1149 = vsel %vm510, %v1077, 0.0
        %1150 = vadd.xlane.f32.xlu0 %v1149
        %v1151 = vpop.xlane.xlu0 %1150
        %v1152 = vsel %vm510, %v1078, 0.0
        %1153 = vadd.xlane.f32.xlu0 %v1152
        %v1154 = vpop.xlane.xlu0 %1153
        %v1155 = vsel %vm510, %v1079, 0.0
        %1156 = vadd.xlane.f32.xlu0 %v1155
        %v1157 = vpop.xlane.xlu0 %1156
        %v1158 = vsel %vm510, %v1080, 0.0
        %1159 = vadd.xlane.f32.xlu0 %v1158
        %v1160 = vpop.xlane.xlu0 %1159
        %v1161 = vsel %vm510, %v1081, 0.0
        %1162 = vadd.xlane.f32.xlu0 %v1161
        %v1163 = vpop.xlane.xlu0 %1162
        %v1164 = vsel %vm510, %v1082, 0.0
        %1165 = vadd.xlane.f32.xlu0 %v1164
        %v1166 = vpop.xlane.xlu0 %1165
        %v1167 = vsel %vm510, %v1083, 0.0
        %1168 = vadd.xlane.f32.xlu0 %v1167
        %v1169 = vpop.xlane.xlu0 %1168
        %v1170 = vsel %vm510, %v1084, 0.0
        %1171 = vadd.xlane.f32.xlu0 %v1170
        %v1172 = vpop.xlane.xlu0 %1171
        %v1173 = vsel %vm510, %v1085, 0.0
        %1174 = vadd.xlane.f32.xlu0 %v1173
        %v1175 = vpop.xlane.xlu0 %1174
        %v1176 = vsel %vm510, %v1086, 0.0
        %1177 = vadd.xlane.f32.xlu0 %v1176
        %v1178 = vpop.xlane.xlu0 %1177
        %v1179 = vsel %vm510, %v1087, 0.0
        %1180 = vadd.xlane.f32.xlu0 %v1179
        %v1181 = vpop.xlane.xlu0 %1180
        %v1182 = vsel %vm510, %v1088, 0.0
        %1183 = vadd.xlane.f32.xlu0 %v1182
        %v1184 = vpop.xlane.xlu0 %1183
        %v1185 = vsub.f32 %v863, %v1091
        %v1186 = vsub.f32 %v864, %v1094
        %v1187 = vsub.f32 %v865, %v1097
        %v1188 = vsub.f32 %v866, %v1100
        %v1189 = vsub.f32 %v867, %v1103
        %v1190 = vsub.f32 %v868, %v1106
        %v1191 = vsub.f32 %v869, %v1109
        %v1192 = vsub.f32 %v870, %v1112
        %v1193 = vsub.f32 %v871, %v1115
        %v1194 = vsub.f32 %v872, %v1118
        %v1195 = vsub.f32 %v873, %v1121
        %v1196 = vsub.f32 %v874, %v1124
        %v1197 = vsub.f32 %v875, %v1127
        %v1198 = vsub.f32 %v876, %v1130
        %v1199 = vsub.f32 %v877, %v1133
        %v1200 = vsub.f32 %v878, %v1136
        %v1201 = vsub.f32 %v879, %v1139
        %v1202 = vsub.f32 %v880, %v1142
        %v1203 = vsub.f32 %v881, %v1145
        %v1204 = vsub.f32 %v882, %v1148
        %v1205 = vsub.f32 %v883, %v1151
        %v1206 = vsub.f32 %v884, %v1154
        %v1207 = vsub.f32 %v885, %v1157
        %v1208 = vsub.f32 %v886, %v1160
        %v1209 = vsub.f32 %v887, %v1163
        %v1210 = vsub.f32 %v888, %v1166
        %v1211 = vsub.f32 %v889, %v1169
        %v1212 = vsub.f32 %v890, %v1172
        %v1213 = vsub.f32 %v891, %v1175
        %v1214 = vsub.f32 %v892, %v1178
        %v1215 = vsub.f32 %v893, %v1181
        %v1216 = vsub.f32 %v894, %v1184
        %v1217 = vsel %vm446, %v1185, 0.0
        %v1218 = vsel %vm447, %v1186, 0.0
        %v1219 = vsel %vm448, %v1187, 0.0
        %v1220 = vsel %vm449, %v1188, 0.0
        %v1221 = vsel %vm450, %v1189, 0.0
        %v1222 = vsel %vm451, %v1190, 0.0
        %v1223 = vsel %vm452, %v1191, 0.0
        %v1224 = vsel %vm453, %v1192, 0.0
        %v1225 = vsel %vm454, %v1193, 0.0
        %v1226 = vsel %vm455, %v1194, 0.0
        %v1227 = vsel %vm456, %v1195, 0.0
        %v1228 = vsel %vm457, %v1196, 0.0
        %v1229 = vsel %vm458, %v1197, 0.0
        %v1230 = vsel %vm459, %v1198, 0.0
        %v1231 = vsel %vm460, %v1199, 0.0
        %v1232 = vsel %vm461, %v1200, 0.0
        %v1233 = vsel %vm462, %v1201, 0.0
        %v1234 = vsel %vm463, %v1202, 0.0
        %v1235 = vsel %vm464, %v1203, 0.0
        %v1236 = vsel %vm465, %v1204, 0.0
        %v1237 = vsel %vm466, %v1205, 0.0
        %v1238 = vsel %vm467, %v1206, 0.0
        %v1239 = vsel %vm468, %v1207, 0.0
        %v1240 = vsel %vm469, %v1208, 0.0
        %v1241 = vsel %vm470, %v1209, 0.0
        %v1242 = vsel %vm471, %v1210, 0.0
        %v1243 = vsel %vm472, %v1211, 0.0
        %v1244 = vsel %vm473, %v1212, 0.0
        %v1245 = vsel %vm474, %v1213, 0.0
        %v1246 = vsel %vm475, %v1214, 0.0
        %v1247 = vsel %vm476, %v1215, 0.0
        %v1248 = vsel %vm477, %v1216, 0.0
        %vm1249 = vcmask 7168
        %v1250 = vsel %vm1249, %v1217, 0.0
        %v1251 = vsel %vm1249, %v1218, 0.0
        %v1252 = vadd.f32 %v1250, %v1251
        %v1253 = vsel %vm1249, %v1219, 0.0
        %v1254 = vadd.f32 %v1252, %v1253
        %v1255 = vsel %vm1249, %v1220, 0.0
        %v1256 = vadd.f32 %v1254, %v1255
        %v1257 = vsel %vm1249, %v1221, 0.0
        %v1258 = vadd.f32 %v1256, %v1257
        %v1259 = vsel %vm1249, %v1222, 0.0
        %v1260 = vadd.f32 %v1258, %v1259
        %v1261 = vsel %vm1249, %v1223, 0.0
        %v1262 = vadd.f32 %v1260, %v1261
        %v1263 = vsel %vm1249, %v1224, 0.0
        %v1264 = vadd.f32 %v1262, %v1263
        %v1265 = vsel %vm1249, %v1225, 0.0
        %v1266 = vadd.f32 %v1264, %v1265
        %v1267 = vsel %vm1249, %v1226, 0.0
        %v1268 = vadd.f32 %v1266, %v1267
        %v1269 = vsel %vm1249, %v1227, 0.0
        %v1270 = vadd.f32 %v1268, %v1269
        %v1271 = vsel %vm1249, %v1228, 0.0
        %v1272 = vadd.f32 %v1270, %v1271
        %v1273 = vsel %vm1249, %v1229, 0.0
        %v1274 = vadd.f32 %v1272, %v1273
        %v1275 = vsel %vm1249, %v1230, 0.0
        %v1276 = vadd.f32 %v1274, %v1275
        %v1277 = vsel %vm1249, %v1231, 0.0
        %v1278 = vadd.f32 %v1276, %v1277
        %v1279 = vsel %vm1249, %v1232, 0.0
        %v1280 = vadd.f32 %v1278, %v1279
        %v1281 = vsel %vm1249, %v1233, 0.0
        %v1282 = vadd.f32 %v1280, %v1281
        %v1283 = vsel %vm1249, %v1234, 0.0
        %v1284 = vadd.f32 %v1282, %v1283
        %v1285 = vsel %vm1249, %v1235, 0.0
        %v1286 = vadd.f32 %v1284, %v1285
        %v1287 = vsel %vm1249, %v1236, 0.0
        %v1288 = vadd.f32 %v1286, %v1287
        %v1289 = vsel %vm1249, %v1237, 0.0
        %v1290 = vadd.f32 %v1288, %v1289
        %v1291 = vsel %vm1249, %v1238, 0.0
        %v1292 = vadd.f32 %v1290, %v1291
        %v1293 = vsel %vm1249, %v1239, 0.0
        %v1294 = vadd.f32 %v1292, %v1293
        %v1295 = vsel %vm1249, %v1240, 0.0
        %v1296 = vadd.f32 %v1294, %v1295
        %v1297 = vsel %vm1249, %v1241, 0.0
        %v1298 = vadd.f32 %v1296, %v1297
        %v1299 = vsel %vm1249, %v1242, 0.0
        %v1300 = vadd.f32 %v1298, %v1299
        %v1301 = vsel %vm1249, %v1243, 0.0
        %v1302 = vadd.f32 %v1300, %v1301
        %v1303 = vsel %vm1249, %v1244, 0.0
        %v1304 = vadd.f32 %v1302, %v1303
        %v1305 = vsel %vm1249, %v1245, 0.0
        %v1306 = vadd.f32 %v1304, %v1305
        %v1307 = vsel %vm1249, %v1246, 0.0
        %v1308 = vadd.f32 %v1306, %v1307
        %v1309 = vsel %vm1249, %v1247, 0.0
        %v1310 = vadd.f32 %v1308, %v1309
        %v1311 = vsel %vm1249, %v1248, 0.0
        %v1312 = vadd.f32 %v1310, %v1311
        %1313 = vadd.xlane.f32.xlu0 %v1312
        %v1314 = vpop.xlane.xlu0 %1313
        %v1315 = vrot.slane %v1314, 4
        %v1316 = vadd.f32 %v1314, %v1315
        %v1317 = vrot.slane %v1316, 2
        %v1318 = vadd.f32 %v1316, %v1317
        %v1319 = vrot.slane %v1318, 1
        %v1320 = vadd.f32 %v1318, %v1319
        %s1321 = vtos %v1320
        %v1322 = vld [vmem:[%s371] sm:$0xff]
        %v1323 = vld [vmem:[%s359] sm:$0xff]
        %v1324 = vld [vmem:[%s365] sm:$0xff]
        %v1325 = vsub.f32 %v1323, %v1324
        %v1326 = vmul.f32 %v1325, %v1322
        %v1327 = vand.u32 2147483647, %v1326
        %vm1328 = vcmp.lt.f32.partialorder %v1327, 1.0
        %v1329 = vmul.f32 %v1326, 0.5
        %v1330 = vmul.f32 %v1329, %v1326
        %v1331 = vsub.f32 %v1327, 0.5
        %v1332 = vsel %vm1328, %v1330, %v1331
        %1333 = vadd.xlane.f32.xlu0 %v1332
        %v1334 = vpop.xlane.xlu0 %1333
        %v1335 = vrot.slane %v1334, 4
        %v1336 = vadd.f32 %v1334, %v1335
        %v1337 = vrot.slane %v1336, 2
        %v1338 = vadd.f32 %v1336, %v1337
        %v1339 = vrot.slane %v1338, 1
        %v1340 = vadd.f32 %v1338, %v1339
        %s1341 = vtos %v1340
        %1342 = vadd.xlane.f32.xlu0 %v1322
        %v1343 = vpop.xlane.xlu0 %1342
        %v1344 = vrot.slane %v1343, 4
        %v1345 = vadd.f32 %v1343, %v1344
        %v1346 = vrot.slane %v1345, 2
        %v1347 = vadd.f32 %v1345, %v1346
        %v1348 = vrot.slane %v1347, 1
        %v1349 = vadd.f32 %v1347, %v1348
        %s1350 = vtos %v1349
        %vm1351 = vcmp.eq.s32.totalorder %v896, 0
        %v1352 = vstv %s1321
        %v1353 = vsel %vm1351, %v1352, 0.0
        %vm1354 = vcmp.eq.s32.totalorder %v896, 1
        %v1355 = vstv %s1341
        %v1356 = vsel %vm1354, %v1355, 0.0
        %v1357 = vadd.f32 %v1353, %v1356
        %vm1358 = vcmp.eq.s32.totalorder %v896, 2
        %v1359 = vstv %s1350
        %v1360 = vsel %vm1358, %v1359, 0.0
        %v1361 = vadd.f32 %v1357, %v1360
        %v1362 = vld [vmem:[%s330] sm:$0xff]
        %v1363 = vadd.f32 %v1362, %v1361
        %1364 = vst [vmem:[%s330] sm:$0xff] %v1363
        %s1365 = sand.u32 %s187, 1
        %s1366 = scalar_lea.sflag [#allocation3], %s1365
        %s1367 = sand.u32 %s187, 1
        %s1368 = smul.addr %s1367, 8
        %s1369 = scalar_lea.vmem [#allocation2], %s1368
        // Predicated region
        $region45: #{tpu_custom_call.1} parent=39 // pred_check
          %p1370 = pneg %p197
        $region46: #{tpu_custom_call.1} parent=39 // pred_check_branch
          %1372 = sbr.rel (%p1370) target = $region48
        $region47: #{tpu_custom_call.1} parent=39 // pred_region
          %s1374 = ssub.s32 128, 128
          %1375 = vsyncadd %s1366, %s1374
          %s1376 = smul.addr %s23, 128
          %s1377 = scalar_lea.hbm %s5, %s1376
          %s1379 = sshll.u32 %s1369, 4
          %s1380 = int_to_ptr.vmem [resolvable:$true] %s1379
          %1382 = dma.vmem_to_hbm [thread:$0]  %s1380, 128, %s1377, %s1366
        $region48: #{tpu_custom_call.1} parent=39 // pred_fallthru
          _
      $region40: #{tpu_custom_call.1} parent=5 // pred_fallthru
        _
      %p1383 = scmp.le.s32.totalorder 2, %s14
      // Predicated region
      $region49: #{tpu_custom_call.1} parent=5 // pred_check
        %p1384 = pneg %p1383
      $region50: #{tpu_custom_call.1} parent=5 // pred_check_branch
        %1386 = sbr.rel (%p1384) target = $region52
      $region51: #{tpu_custom_call.1} parent=5 // pred_region
        %s1387 = ssub.s32 %s14, 2
        // Predicated region
        $region53: #{tpu_custom_call.1} parent=51 // pred_check
          %p1388 = pneg %p203
        $region54: #{tpu_custom_call.1} parent=51 // pred_check_branch
          %1390 = sbr.rel (%p1388) target = $region56
        $region55: #{tpu_custom_call.1} parent=51 // pred_region
          %s1391 = sand.u32 %s188, 1
          %s1392 = scalar_lea.sflag [#allocation3], %s1391
          %s1393 = sand.u32 %s188, 1
          %s1394 = smul.addr %s1393, 8
          %s1395 = scalar_lea.vmem [#allocation2], %s1394
          %1396 = dma.done %s1392, 128
        $region56: #{tpu_custom_call.1} parent=51 // pred_fallthru
          _
      $region52: #{tpu_custom_call.1} parent=5 // pred_fallthru
        _
    $region6: #{tpu_custom_call.1} parent=1 // loop_footer
      %s18 = sadd.s32 1, %s14
    $region7: #{tpu_custom_call.1} parent=1 // loop_footer_branch
      %13 = sbr.rel target = $region3
    $region8: #{tpu_custom_call.1} parent=1 // loop_exit
      _
    %1397 = vsyncpa [#allocation3], 1
    %s1398 = scalar_lea.sflag [#allocation3], 1
    %1399 = vsyncpa %s1398, 1

</llo_original>
